<compile_context>
chip_gen: v6e
topology: v6e:2x2x1
jax: 0.10.0
libtpu: 0.0.40
codegen_flags: <defaults>
</compile_context>

<pallas_src>
import functools

import jax
import jax.numpy as jnp
from jax.experimental import pallas as pl
from jax.experimental.pallas import tpu as pltpu


def _round_up(n, m):
    return ((n + m - 1) // m) * m


def mlp_kernel(x_ref, w1_ref, b1_ref, w2_ref, b2_ref, o_ref):
    # Hot path: two MXU matmuls + VPU ReLU, fused over one batch tile.
    # TODO(synk): if dim/hidden scale up, feed the matmuls in bf16 on v6e/v7x
    # (cast x/W1/W2, keep preferred_element_type=f32) and K-tile with an
    # accumulator instead of keeping full weights resident.
    x = x_ref[...]                                                      # (tb, dim)
    h = jnp.dot(x, w1_ref[...], preferred_element_type=jnp.float32) + b1_ref[...]
    h = jnp.maximum(h, 0.0)                                             # ReLU on full vregs
    y = jnp.dot(h, w2_ref[...], preferred_element_type=jnp.float32) + b2_ref[...]
    o_ref[...] = y.astype(o_ref.dtype)


def pad_params(w1, b1, w2, b2, *, out_pad=128):
    """Pad params once at setup (hoisted out of the per-call forward path).

    w1: (dim, hidden), b1: (1, hidden), w2: (hidden, k), b2: (1, k).
    hidden is padded to a multiple of 128 (lane-dense intermediates); k is
    padded to a multiple of `out_pad` (128 = lane-dense stores; 32/16 = less
    HBM writeback for large-B throughput)."""
    hidden = w1.shape[1]
    k = w2.shape[1]
    hp = _round_up(hidden, 128)
    kp = _round_up(k, out_pad)
    w1p = jnp.pad(w1, ((0, 0), (0, hp - hidden)))
    b1p = jnp.pad(b1, ((0, 0), (0, hp - hidden)))
    w2p = jnp.pad(w2, ((0, hp - hidden), (0, kp - k)))
    b2p = jnp.pad(b2, ((0, 0), (0, kp - k)))
    return (w1p, b1p, w2p, b2p)


@functools.partial(jax.jit, static_argnames=("k", "max_tile_b"))
def mlp_forward_padded(x3, w1p, b1p, w2p, b2p, *, k, max_tile_b=512):
    """x3: (B, 1, dim) f32 DataLoader-style batch; padded params from pad_params().
    Returns (B, k)."""
    B, _, dim = x3.shape
    hp = w1p.shape[1]
    kp = w2p.shape[1]

    # Overhead-bound regime: one grid step for B <= max_tile_b (B=256 -> one
    # 256-row tile); larger batches use max_tile_b-row tiles so each parallel
    # step (and each v7x TensorCore) gets >= 512 rows of real work.
    tile_b = min(max_tile_b, _round_up(B, 8))
    Bp = _round_up(B, tile_b)
    xp = x3 if Bp == B else jnp.pad(x3, ((0, Bp - B), (0, 0), (0, 0)))
    grid = (Bp // tile_b,)

    flops = 2 * Bp * dim * hp + 2 * Bp * hp * kp
    bytes_accessed = 4 * (Bp * dim + dim * hp + hp + hp * kp + kp + Bp * kp)

    out_padded = pl.pallas_call(
        mlp_kernel,
        out_shape=jax.ShapeDtypeStruct((Bp, kp), x3.dtype),
        grid=grid,
        in_specs=[
            # x: (tile_b, 1, dim) block; the singleton DataLoader dim is
            # squeezed in-kernel (no wrapper jnp.squeeze, no B==1 hazard).
            pl.BlockSpec((tile_b, None, dim), lambda i: (i, 0, 0)),
            # Weights/biases resident across the (tiny) batch grid.
            # TODO(synk): when dim/hidden grow, mark these
            # pipeline_mode=pl.Buffered(1) so resident blocks are not
            # double-buffered under v7x's 64 MiB VMEM.
            pl.BlockSpec((dim, hp), lambda i: (0, 0)),   # W1 (cols zero-padded)
            pl.BlockSpec((1, hp), lambda i: (0, 0)),     # b1
            pl.BlockSpec((hp, kp), lambda i: (0, 0)),    # W2 (rows/cols zero-padded)
            pl.BlockSpec((1, kp), lambda i: (0, 0)),     # b2
        ],
        out_specs=pl.BlockSpec((tile_b, kp), lambda i: (i, 0)),
        compiler_params=pltpu.CompilerParams(
            dimension_semantics=("parallel",),           # only >=512-row tiles split
            vmem_limit_bytes=32 * 1024 * 1024,
        ),
        cost_estimate=pl.CostEstimate(
            flops=flops, transcendentals=0, bytes_accessed=bytes_accessed),
    )(xp, w1p, b1p, w2p, b2p)

    # Slice batch-pad rows and output-pad lanes off.  If a downstream consumer
    # can accept the (B, kp) padded slab, return out_padded[:B] instead and
    # save one wrapper copy.
    return out_padded[:B, :k]


def net_forward(x, padded_params, k):
    """Mirrors net.forward(x, dataset): squeeze -> fc1 -> ReLU -> fc2."""
    return mlp_forward_padded(x, *padded_params, k=k)


def init_params(key, dim, hidden_size=100, k=10, dtype=jnp.float32):
    # Deterministic synthetic init (uniform, roughly nn.Linear scale), stored
    # as (in, out) / (1, out).
    k1, k2, k3, k4 = jax.random.split(key, 4)
    lim1 = 1.0 / jnp.sqrt(dim)
    lim2 = 1.0 / jnp.sqrt(hidden_size)
    w1 = jax.random.uniform(k1, (dim, hidden_size), dtype, -lim1, lim1)
    b1 = jax.random.uniform(k2, (1, hidden_size), dtype, -lim1, lim1)
    w2 = jax.random.uniform(k3, (hidden_size, k), dtype, -lim2, lim2)
    b2 = jax.random.uniform(k4, (1, k), dtype, -lim2, lim2)
    return (w1, b1, w2, b2)


if __name__ == "__main__":
    key = jax.random.PRNGKey(0)
    key_x, key_p = jax.random.split(key)

    # Module defaults: hidden_size=100, k=10.  Batch 256 -> a single 256-row
    # tile (one grid step).
    B, dim, hidden, kk = 256, 32, 100, 10
    # DataLoader-style (B, 1, dim) input; forward squeezes it to (B, dim).
    x = jax.random.normal(key_x, (B, 1, dim), dtype=jnp.float32)
    w1, b1, w2, b2 = init_params(key_p, dim, hidden, kk)

    # Pad weights ONCE at setup (hoisted out of the forward path).
    padded_params = jax.block_until_ready(pad_params(w1, b1, w2, b2, out_pad=128))

    out = net_forward(x, padded_params, kk)
    out = jax.block_until_ready(out)

    # Pure-JAX reference (unpadded math).
    xr = x.reshape(B, dim)
    ref = jnp.maximum(xr @ w1 + b1, 0.0) @ w2 + b2
    assert out.shape == (B, kk)
    assert jnp.allclose(out, ref, atol=1e-5, rtol=1e-5)

    print("KERNEL_OK")
</pallas_src>

<mosaic_0001>
module attributes {stable_mosaic.version = 11 : i64} {
  func.func @mlp_kernel(%arg0: i32, %arg1: memref<256x1x32xf32, #tpu.memory_space<vmem>>, %arg2: memref<32x128xf32, #tpu.memory_space<vmem>>, %arg3: memref<1x128xf32, #tpu.memory_space<vmem>>, %arg4: memref<128x128xf32, #tpu.memory_space<vmem>>, %arg5: memref<1x128xf32, #tpu.memory_space<vmem>>, %arg6: memref<256x128xf32, #tpu.memory_space<vmem>>) attributes {dimension_semantics = [#tpu.dimension_semantics<parallel>], iteration_bounds = array<i64: 1>, scalar_prefetch = 0 : i64, scratch_operands = 0 : i64, tpu.core_type = #tpu.core_type<tc>, window_params = [{transform_indices = @transform_0, window_bounds = array<i64: 256, 1, 32>}, {pipeline_mode = #tpu.pipeline_mode<synchronous>, transform_indices = @transform_1, window_bounds = array<i64: 32, 128>}, {pipeline_mode = #tpu.pipeline_mode<synchronous>, transform_indices = @transform_2, window_bounds = array<i64: 1, 128>}, {pipeline_mode = #tpu.pipeline_mode<synchronous>, transform_indices = @transform_3, window_bounds = array<i64: 128, 128>}, {pipeline_mode = #tpu.pipeline_mode<synchronous>, transform_indices = @transform_4, window_bounds = array<i64: 1, 128>}, {transform_indices = @transform_5, window_bounds = array<i64: 256, 128>}]} {
    %c0 = arith.constant 0 : index
    %c0_0 = arith.constant 0 : index
    %c0_1 = arith.constant 0 : index
    %0 = vector.load %arg1[%c0, %c0_0, %c0_1] : memref<256x1x32xf32, #tpu.memory_space<vmem>>, vector<256x1x32xf32>
    %1 = vector.shape_cast %0 : vector<256x1x32xf32> to vector<256x32xf32>
    %c0_2 = arith.constant 0 : index
    %c0_3 = arith.constant 0 : index
    %2 = vector.load %arg2[%c0_2, %c0_3] : memref<32x128xf32, #tpu.memory_space<vmem>>, vector<32x128xf32>
    %cst = arith.constant dense<0.000000e+00> : vector<256x128xf32>
    %3 = tpu.matmul %1, %2, %cst {dimension_numbers = #tpu.dot_dimension_numbers<[1], [0], [0], [1], [0, 0, 1, 1], [], []>} : vector<256x32xf32>, vector<32x128xf32>, vector<256x128xf32> -> vector<256x128xf32>
    %c0_4 = arith.constant 0 : index
    %c0_5 = arith.constant 0 : index
    %4 = vector.load %arg3[%c0_4, %c0_5] : memref<1x128xf32, #tpu.memory_space<vmem>>, vector<1x128xf32>
    %5 = vector.broadcast %4 : vector<1x128xf32> to vector<256x128xf32>
    %6 = arith.addf %3, %5 : vector<256x128xf32>
    %cst_6 = arith.constant 0.000000e+00 : f32
    %7 = vector.broadcast %cst_6 : f32 to vector<256x128xf32>
    %8 = arith.maximumf %6, %7 : vector<256x128xf32>
    %c0_7 = arith.constant 0 : index
    %c0_8 = arith.constant 0 : index
    %9 = vector.load %arg4[%c0_7, %c0_8] : memref<128x128xf32, #tpu.memory_space<vmem>>, vector<128x128xf32>
    %cst_9 = arith.constant dense<0.000000e+00> : vector<256x128xf32>
    %10 = tpu.matmul %8, %9, %cst_9 {dimension_numbers = #tpu.dot_dimension_numbers<[1], [0], [0], [1], [0, 0, 1, 1], [], []>} : vector<256x128xf32>, vector<128x128xf32>, vector<256x128xf32> -> vector<256x128xf32>
    %c0_10 = arith.constant 0 : index
    %c0_11 = arith.constant 0 : index
    %11 = vector.load %arg5[%c0_10, %c0_11] : memref<1x128xf32, #tpu.memory_space<vmem>>, vector<1x128xf32>
    %12 = vector.broadcast %11 : vector<1x128xf32> to vector<256x128xf32>
    %13 = arith.addf %10, %12 : vector<256x128xf32>
    %c0_12 = arith.constant 0 : index
    %c0_13 = arith.constant 0 : index
    %14 = vector.load %arg6[%c0_12, %c0_13] : memref<256x128xf32, #tpu.memory_space<vmem>>, vector<256x128xf32>
    tpu.vector_store %arg6[%c0_12, %c0_13], %13 {strides = array<i32>} : memref<256x128xf32, #tpu.memory_space<vmem>>, vector<256x128xf32>,
    return
  }
  func.func @transform_0(%arg0: i32) -> (i32, i32, i32) {
    %c0_i32 = arith.constant 0 : i32
    %c0_i32_0 = arith.constant 0 : i32
    %c0_i32_1 = arith.constant 0 : i32
    return %arg0, %c0_i32, %c0_i32_0 : i32, i32, i32
  }
  func.func @transform_1(%arg0: i32) -> (i32, i32) {
    %c0_i32 = arith.constant 0 : i32
    %c0_i32_0 = arith.constant 0 : i32
    %c0_i32_1 = arith.constant 0 : i32
    return %c0_i32, %c0_i32_0 : i32, i32
  }
  func.func @transform_2(%arg0: i32) -> (i32, i32) {
    %c0_i32 = arith.constant 0 : i32
    %c0_i32_0 = arith.constant 0 : i32
    %c0_i32_1 = arith.constant 0 : i32
    return %c0_i32, %c0_i32_0 : i32, i32
  }
  func.func @transform_3(%arg0: i32) -> (i32, i32) {
    %c0_i32 = arith.constant 0 : i32
    %c0_i32_0 = arith.constant 0 : i32
    %c0_i32_1 = arith.constant 0 : i32
    return %c0_i32, %c0_i32_0 : i32, i32
  }
  func.func @transform_4(%arg0: i32) -> (i32, i32) {
    %c0_i32 = arith.constant 0 : i32
    %c0_i32_0 = arith.constant 0 : i32
    %c0_i32_1 = arith.constant 0 : i32
    return %c0_i32, %c0_i32_0 : i32, i32
  }
  func.func @transform_5(%arg0: i32) -> (i32, i32) {
    %c0_i32 = arith.constant 0 : i32
    %c0_i32_0 = arith.constant 0 : i32
    return %arg0, %c0_i32 : i32, i32
  }
}

</mosaic_0001>

<llo_original>
// kernel: mlp_forward_padded.1
$region0: #{mlp_forward_padded.1}
  #allocation0 [shape = 'u32[]', space=smem, size = 0x4, offset = 0x4, fixed_abs, tag = 'smem constant byte address 0x4 - core index']
  #allocation1 [shape = 'u32[144,128]{1,0:T(1,128)}', space=vmem, size = 0x12000, scoped, tag = 'internal scratch']
  %s0 = inlined_call_operand.vmem [shape: f32[256,1,32], index: 0, kind: input, shape index: {}]
  %s1 = inlined_call_operand.vmem [shape: f32[32,128], index: 1, kind: input, shape index: {}]
  %s2 = inlined_call_operand.vmem [shape: f32[1,128], index: 2, kind: input, shape index: {}]
  %s3 = inlined_call_operand.vmem [shape: f32[128,128], index: 3, kind: input, shape index: {}]
  %s4 = inlined_call_operand.vmem [shape: f32[1,128], index: 4, kind: input, shape index: {}]
  %s5 = inlined_call_operand.vmem [shape: f32[256,128], index: 5, kind: output, shape index: {}]
  %s6 = sld [smem:[#allocation0]]
  $region30: #{mlp_forward_padded.1} parent=0
    _
  %s8 = ssub.s32 1, %s6
  %s9 = scalar_select 0, %s8, %s6
  // Predicated region
  $region2: #{mlp_forward_padded.1} parent=0 // pred_check
    _
  $region3: #{mlp_forward_padded.1} parent=0 // pred_check_branch
    %11 = sbr.rel (0) target = $region5
  $region4: #{mlp_forward_padded.1} parent=0 // pred_region
    _
  $region5: #{mlp_forward_padded.1} parent=0 // pred_fallthru
    _
  // Predicated region
  $region6: #{mlp_forward_padded.1} parent=0 // pred_check
    _
  $region7: #{mlp_forward_padded.1} parent=0 // pred_check_branch
    %13 = sbr.rel (0) target = $region9
  $region8: #{mlp_forward_padded.1} parent=0 // pred_region
    _
  $region9: #{mlp_forward_padded.1} parent=0 // pred_fallthru
    _
  // Predicated region
  $region10: #{mlp_forward_padded.1} parent=0 // pred_check
    _
  $region11: #{mlp_forward_padded.1} parent=0 // pred_check_branch
    %15 = sbr.rel (0) target = $region13
  $region12: #{mlp_forward_padded.1} parent=0 // pred_region
    _
  $region13: #{mlp_forward_padded.1} parent=0 // pred_fallthru
    _
  // Predicated region
  $region14: #{mlp_forward_padded.1} parent=0 // pred_check
    _
  $region15: #{mlp_forward_padded.1} parent=0 // pred_check_branch
    %17 = sbr.rel (0) target = $region17
  $region16: #{mlp_forward_padded.1} parent=0 // pred_region
    _
  $region17: #{mlp_forward_padded.1} parent=0 // pred_fallthru
    _
  // Predicated region
  $region18: #{mlp_forward_padded.1} parent=0 // pred_check
    _
  $region19: #{mlp_forward_padded.1} parent=0 // pred_check_branch
    %19 = sbr.rel (0) target = $region21
  $region20: #{mlp_forward_padded.1} parent=0 // pred_region
    _
  $region21: #{mlp_forward_padded.1} parent=0 // pred_fallthru
    _
  %v20 = vld [vmem:[%s0] sm:$0x1]
  %v21 = vld [vmem:[%s0 + $0x1] sm:$0x1]
  %v22 = vld [vmem:[%s0 + $0x2] sm:$0x1]
  %v23 = vld [vmem:[%s0 + $0x3] sm:$0x1]
  %v24 = vld [vmem:[%s0 + $0x4] sm:$0x1]
  %v25 = vld [vmem:[%s0 + $0x5] sm:$0x1]
  %v26 = vld [vmem:[%s0 + $0x6] sm:$0x1]
  %v27 = vld [vmem:[%s0 + $0x7] sm:$0x1]
  %v28 = vld [vmem:[%s0 + $0x8] sm:$0x1]
  %v29 = vld [vmem:[%s0 + $0x9] sm:$0x1]
  %v30 = vld [vmem:[%s0 + $0xa] sm:$0x1]
  %v31 = vld [vmem:[%s0 + $0xb] sm:$0x1]
  %v32 = vld [vmem:[%s0 + $0xc] sm:$0x1]
  %v33 = vld [vmem:[%s0 + $0xd] sm:$0x1]
  %v34 = vld [vmem:[%s0 + $0xe] sm:$0x1]
  %v35 = vld [vmem:[%s0 + $0xf] sm:$0x1]
  %v36 = vld [vmem:[%s0 + $0x10] sm:$0x1]
  %v37 = vld [vmem:[%s0 + $0x11] sm:$0x1]
  %v38 = vld [vmem:[%s0 + $0x12] sm:$0x1]
  %v39 = vld [vmem:[%s0 + $0x13] sm:$0x1]
  %v40 = vld [vmem:[%s0 + $0x14] sm:$0x1]
  %v41 = vld [vmem:[%s0 + $0x15] sm:$0x1]
  %v42 = vld [vmem:[%s0 + $0x16] sm:$0x1]
  %v43 = vld [vmem:[%s0 + $0x17] sm:$0x1]
  %v44 = vld [vmem:[%s0 + $0x18] sm:$0x1]
  %v45 = vld [vmem:[%s0 + $0x19] sm:$0x1]
  %v46 = vld [vmem:[%s0 + $0x1a] sm:$0x1]
  %v47 = vld [vmem:[%s0 + $0x1b] sm:$0x1]
  %v48 = vld [vmem:[%s0 + $0x1c] sm:$0x1]
  %v49 = vld [vmem:[%s0 + $0x1d] sm:$0x1]
  %v50 = vld [vmem:[%s0 + $0x1e] sm:$0x1]
  %v51 = vld [vmem:[%s0 + $0x1f] sm:$0x1]
  %v52 = vld [vmem:[%s0 + $0x20] sm:$0x1]
  %v53 = vld [vmem:[%s0 + $0x21] sm:$0x1]
  %v54 = vld [vmem:[%s0 + $0x22] sm:$0x1]
  %v55 = vld [vmem:[%s0 + $0x23] sm:$0x1]
  %v56 = vld [vmem:[%s0 + $0x24] sm:$0x1]
  %v57 = vld [vmem:[%s0 + $0x25] sm:$0x1]
  %v58 = vld [vmem:[%s0 + $0x26] sm:$0x1]
  %v59 = vld [vmem:[%s0 + $0x27] sm:$0x1]
  %v60 = vld [vmem:[%s0 + $0x28] sm:$0x1]
  %v61 = vld [vmem:[%s0 + $0x29] sm:$0x1]
  %v62 = vld [vmem:[%s0 + $0x2a] sm:$0x1]
  %v63 = vld [vmem:[%s0 + $0x2b] sm:$0x1]
  %v64 = vld [vmem:[%s0 + $0x2c] sm:$0x1]
  %v65 = vld [vmem:[%s0 + $0x2d] sm:$0x1]
  %v66 = vld [vmem:[%s0 + $0x2e] sm:$0x1]
  %v67 = vld [vmem:[%s0 + $0x2f] sm:$0x1]
  %v68 = vld [vmem:[%s0 + $0x30] sm:$0x1]
  %v69 = vld [vmem:[%s0 + $0x31] sm:$0x1]
  %v70 = vld [vmem:[%s0 + $0x32] sm:$0x1]
  %v71 = vld [vmem:[%s0 + $0x33] sm:$0x1]
  %v72 = vld [vmem:[%s0 + $0x34] sm:$0x1]
  %v73 = vld [vmem:[%s0 + $0x35] sm:$0x1]
  %v74 = vld [vmem:[%s0 + $0x36] sm:$0x1]
  %v75 = vld [vmem:[%s0 + $0x37] sm:$0x1]
  %v76 = vld [vmem:[%s0 + $0x38] sm:$0x1]
  %v77 = vld [vmem:[%s0 + $0x39] sm:$0x1]
  %v78 = vld [vmem:[%s0 + $0x3a] sm:$0x1]
  %v79 = vld [vmem:[%s0 + $0x3b] sm:$0x1]
  %v80 = vld [vmem:[%s0 + $0x3c] sm:$0x1]
  %v81 = vld [vmem:[%s0 + $0x3d] sm:$0x1]
  %v82 = vld [vmem:[%s0 + $0x3e] sm:$0x1]
  %v83 = vld [vmem:[%s0 + $0x3f] sm:$0x1]
  %v84 = vld [vmem:[%s0 + $0x40] sm:$0x1]
  %v85 = vld [vmem:[%s0 + $0x41] sm:$0x1]
  %v86 = vld [vmem:[%s0 + $0x42] sm:$0x1]
  %v87 = vld [vmem:[%s0 + $0x43] sm:$0x1]
  %v88 = vld [vmem:[%s0 + $0x44] sm:$0x1]
  %v89 = vld [vmem:[%s0 + $0x45] sm:$0x1]
  %v90 = vld [vmem:[%s0 + $0x46] sm:$0x1]
  %v91 = vld [vmem:[%s0 + $0x47] sm:$0x1]
  %v92 = vld [vmem:[%s0 + $0x48] sm:$0x1]
  %v93 = vld [vmem:[%s0 + $0x49] sm:$0x1]
  %v94 = vld [vmem:[%s0 + $0x4a] sm:$0x1]
  %v95 = vld [vmem:[%s0 + $0x4b] sm:$0x1]
  %v96 = vld [vmem:[%s0 + $0x4c] sm:$0x1]
  %v97 = vld [vmem:[%s0 + $0x4d] sm:$0x1]
  %v98 = vld [vmem:[%s0 + $0x4e] sm:$0x1]
  %v99 = vld [vmem:[%s0 + $0x4f] sm:$0x1]
  %v100 = vld [vmem:[%s0 + $0x50] sm:$0x1]
  %v101 = vld [vmem:[%s0 + $0x51] sm:$0x1]
  %v102 = vld [vmem:[%s0 + $0x52] sm:$0x1]
  %v103 = vld [vmem:[%s0 + $0x53] sm:$0x1]
  %v104 = vld [vmem:[%s0 + $0x54] sm:$0x1]
  %v105 = vld [vmem:[%s0 + $0x55] sm:$0x1]
  %v106 = vld [vmem:[%s0 + $0x56] sm:$0x1]
  %v107 = vld [vmem:[%s0 + $0x57] sm:$0x1]
  %v108 = vld [vmem:[%s0 + $0x58] sm:$0x1]
  %v109 = vld [vmem:[%s0 + $0x59] sm:$0x1]
  %v110 = vld [vmem:[%s0 + $0x5a] sm:$0x1]
  %v111 = vld [vmem:[%s0 + $0x5b] sm:$0x1]
  %v112 = vld [vmem:[%s0 + $0x5c] sm:$0x1]
  %v113 = vld [vmem:[%s0 + $0x5d] sm:$0x1]
  %v114 = vld [vmem:[%s0 + $0x5e] sm:$0x1]
  %v115 = vld [vmem:[%s0 + $0x5f] sm:$0x1]
  %v116 = vld [vmem:[%s0 + $0x60] sm:$0x1]
  %v117 = vld [vmem:[%s0 + $0x61] sm:$0x1]
  %v118 = vld [vmem:[%s0 + $0x62] sm:$0x1]
  %v119 = vld [vmem:[%s0 + $0x63] sm:$0x1]
  %v120 = vld [vmem:[%s0 + $0x64] sm:$0x1]
  %v121 = vld [vmem:[%s0 + $0x65] sm:$0x1]
  %v122 = vld [vmem:[%s0 + $0x66] sm:$0x1]
  %v123 = vld [vmem:[%s0 + $0x67] sm:$0x1]
  %v124 = vld [vmem:[%s0 + $0x68] sm:$0x1]
  %v125 = vld [vmem:[%s0 + $0x69] sm:$0x1]
  %v126 = vld [vmem:[%s0 + $0x6a] sm:$0x1]
  %v127 = vld [vmem:[%s0 + $0x6b] sm:$0x1]
  %v128 = vld [vmem:[%s0 + $0x6c] sm:$0x1]
  %v129 = vld [vmem:[%s0 + $0x6d] sm:$0x1]
  %v130 = vld [vmem:[%s0 + $0x6e] sm:$0x1]
  %v131 = vld [vmem:[%s0 + $0x6f] sm:$0x1]
  %v132 = vld [vmem:[%s0 + $0x70] sm:$0x1]
  %v133 = vld [vmem:[%s0 + $0x71] sm:$0x1]
  %v134 = vld [vmem:[%s0 + $0x72] sm:$0x1]
  %v135 = vld [vmem:[%s0 + $0x73] sm:$0x1]
  %v136 = vld [vmem:[%s0 + $0x74] sm:$0x1]
  %v137 = vld [vmem:[%s0 + $0x75] sm:$0x1]
  %v138 = vld [vmem:[%s0 + $0x76] sm:$0x1]
  %v139 = vld [vmem:[%s0 + $0x77] sm:$0x1]
  %v140 = vld [vmem:[%s0 + $0x78] sm:$0x1]
  %v141 = vld [vmem:[%s0 + $0x79] sm:$0x1]
  %v142 = vld [vmem:[%s0 + $0x7a] sm:$0x1]
  %v143 = vld [vmem:[%s0 + $0x7b] sm:$0x1]
  %v144 = vld [vmem:[%s0 + $0x7c] sm:$0x1]
  %v145 = vld [vmem:[%s0 + $0x7d] sm:$0x1]
  %v146 = vld [vmem:[%s0 + $0x7e] sm:$0x1]
  %v147 = vld [vmem:[%s0 + $0x7f] sm:$0x1]
  %v148 = vld [vmem:[%s0 + $0x80] sm:$0x1]
  %v149 = vld [vmem:[%s0 + $0x81] sm:$0x1]
  %v150 = vld [vmem:[%s0 + $0x82] sm:$0x1]
  %v151 = vld [vmem:[%s0 + $0x83] sm:$0x1]
  %v152 = vld [vmem:[%s0 + $0x84] sm:$0x1]
  %v153 = vld [vmem:[%s0 + $0x85] sm:$0x1]
  %v154 = vld [vmem:[%s0 + $0x86] sm:$0x1]
  %v155 = vld [vmem:[%s0 + $0x87] sm:$0x1]
  %v156 = vld [vmem:[%s0 + $0x88] sm:$0x1]
  %v157 = vld [vmem:[%s0 + $0x89] sm:$0x1]
  %v158 = vld [vmem:[%s0 + $0x8a] sm:$0x1]
  %v159 = vld [vmem:[%s0 + $0x8b] sm:$0x1]
  %v160 = vld [vmem:[%s0 + $0x8c] sm:$0x1]
  %v161 = vld [vmem:[%s0 + $0x8d] sm:$0x1]
  %v162 = vld [vmem:[%s0 + $0x8e] sm:$0x1]
  %v163 = vld [vmem:[%s0 + $0x8f] sm:$0x1]
  %v164 = vld [vmem:[%s0 + $0x90] sm:$0x1]
  %v165 = vld [vmem:[%s0 + $0x91] sm:$0x1]
  %v166 = vld [vmem:[%s0 + $0x92] sm:$0x1]
  %v167 = vld [vmem:[%s0 + $0x93] sm:$0x1]
  %v168 = vld [vmem:[%s0 + $0x94] sm:$0x1]
  %v169 = vld [vmem:[%s0 + $0x95] sm:$0x1]
  %v170 = vld [vmem:[%s0 + $0x96] sm:$0x1]
  %v171 = vld [vmem:[%s0 + $0x97] sm:$0x1]
  %v172 = vld [vmem:[%s0 + $0x98] sm:$0x1]
  %v173 = vld [vmem:[%s0 + $0x99] sm:$0x1]
  %v174 = vld [vmem:[%s0 + $0x9a] sm:$0x1]
  %v175 = vld [vmem:[%s0 + $0x9b] sm:$0x1]
  %v176 = vld [vmem:[%s0 + $0x9c] sm:$0x1]
  %v177 = vld [vmem:[%s0 + $0x9d] sm:$0x1]
  %v178 = vld [vmem:[%s0 + $0x9e] sm:$0x1]
  %v179 = vld [vmem:[%s0 + $0x9f] sm:$0x1]
  %v180 = vld [vmem:[%s0 + $0xa0] sm:$0x1]
  %v181 = vld [vmem:[%s0 + $0xa1] sm:$0x1]
  %v182 = vld [vmem:[%s0 + $0xa2] sm:$0x1]
  %v183 = vld [vmem:[%s0 + $0xa3] sm:$0x1]
  %v184 = vld [vmem:[%s0 + $0xa4] sm:$0x1]
  %v185 = vld [vmem:[%s0 + $0xa5] sm:$0x1]
  %v186 = vld [vmem:[%s0 + $0xa6] sm:$0x1]
  %v187 = vld [vmem:[%s0 + $0xa7] sm:$0x1]
  %v188 = vld [vmem:[%s0 + $0xa8] sm:$0x1]
  %v189 = vld [vmem:[%s0 + $0xa9] sm:$0x1]
  %v190 = vld [vmem:[%s0 + $0xaa] sm:$0x1]
  %v191 = vld [vmem:[%s0 + $0xab] sm:$0x1]
  %v192 = vld [vmem:[%s0 + $0xac] sm:$0x1]
  %v193 = vld [vmem:[%s0 + $0xad] sm:$0x1]
  %v194 = vld [vmem:[%s0 + $0xae] sm:$0x1]
  %v195 = vld [vmem:[%s0 + $0xaf] sm:$0x1]
  %v196 = vld [vmem:[%s0 + $0xb0] sm:$0x1]
  %v197 = vld [vmem:[%s0 + $0xb1] sm:$0x1]
  %v198 = vld [vmem:[%s0 + $0xb2] sm:$0x1]
  %v199 = vld [vmem:[%s0 + $0xb3] sm:$0x1]
  %v200 = vld [vmem:[%s0 + $0xb4] sm:$0x1]
  %v201 = vld [vmem:[%s0 + $0xb5] sm:$0x1]
  %v202 = vld [vmem:[%s0 + $0xb6] sm:$0x1]
  %v203 = vld [vmem:[%s0 + $0xb7] sm:$0x1]
  %v204 = vld [vmem:[%s0 + $0xb8] sm:$0x1]
  %v205 = vld [vmem:[%s0 + $0xb9] sm:$0x1]
  %v206 = vld [vmem:[%s0 + $0xba] sm:$0x1]
  %v207 = vld [vmem:[%s0 + $0xbb] sm:$0x1]
  %v208 = vld [vmem:[%s0 + $0xbc] sm:$0x1]
  %v209 = vld [vmem:[%s0 + $0xbd] sm:$0x1]
  %v210 = vld [vmem:[%s0 + $0xbe] sm:$0x1]
  %v211 = vld [vmem:[%s0 + $0xbf] sm:$0x1]
  %v212 = vld [vmem:[%s0 + $0xc0] sm:$0x1]
  %v213 = vld [vmem:[%s0 + $0xc1] sm:$0x1]
  %v214 = vld [vmem:[%s0 + $0xc2] sm:$0x1]
  %v215 = vld [vmem:[%s0 + $0xc3] sm:$0x1]
  %v216 = vld [vmem:[%s0 + $0xc4] sm:$0x1]
  %v217 = vld [vmem:[%s0 + $0xc5] sm:$0x1]
  %v218 = vld [vmem:[%s0 + $0xc6] sm:$0x1]
  %v219 = vld [vmem:[%s0 + $0xc7] sm:$0x1]
  %v220 = vld [vmem:[%s0 + $0xc8] sm:$0x1]
  %v221 = vld [vmem:[%s0 + $0xc9] sm:$0x1]
  %v222 = vld [vmem:[%s0 + $0xca] sm:$0x1]
  %v223 = vld [vmem:[%s0 + $0xcb] sm:$0x1]
  %v224 = vld [vmem:[%s0 + $0xcc] sm:$0x1]
  %v225 = vld [vmem:[%s0 + $0xcd] sm:$0x1]
  %v226 = vld [vmem:[%s0 + $0xce] sm:$0x1]
  %v227 = vld [vmem:[%s0 + $0xcf] sm:$0x1]
  %v228 = vld [vmem:[%s0 + $0xd0] sm:$0x1]
  %v229 = vld [vmem:[%s0 + $0xd1] sm:$0x1]
  %v230 = vld [vmem:[%s0 + $0xd2] sm:$0x1]
  %v231 = vld [vmem:[%s0 + $0xd3] sm:$0x1]
  %v232 = vld [vmem:[%s0 + $0xd4] sm:$0x1]
  %v233 = vld [vmem:[%s0 + $0xd5] sm:$0x1]
  %v234 = vld [vmem:[%s0 + $0xd6] sm:$0x1]
  %v235 = vld [vmem:[%s0 + $0xd7] sm:$0x1]
  %v236 = vld [vmem:[%s0 + $0xd8] sm:$0x1]
  %v237 = vld [vmem:[%s0 + $0xd9] sm:$0x1]
  %v238 = vld [vmem:[%s0 + $0xda] sm:$0x1]
  %v239 = vld [vmem:[%s0 + $0xdb] sm:$0x1]
  %v240 = vld [vmem:[%s0 + $0xdc] sm:$0x1]
  %v241 = vld [vmem:[%s0 + $0xdd] sm:$0x1]
  %v242 = vld [vmem:[%s0 + $0xde] sm:$0x1]
  %v243 = vld [vmem:[%s0 + $0xdf] sm:$0x1]
  %v244 = vld [vmem:[%s0 + $0xe0] sm:$0x1]
  %v245 = vld [vmem:[%s0 + $0xe1] sm:$0x1]
  %v246 = vld [vmem:[%s0 + $0xe2] sm:$0x1]
  %v247 = vld [vmem:[%s0 + $0xe3] sm:$0x1]
  %v248 = vld [vmem:[%s0 + $0xe4] sm:$0x1]
  %v249 = vld [vmem:[%s0 + $0xe5] sm:$0x1]
  %v250 = vld [vmem:[%s0 + $0xe6] sm:$0x1]
  %v251 = vld [vmem:[%s0 + $0xe7] sm:$0x1]
  %v252 = vld [vmem:[%s0 + $0xe8] sm:$0x1]
  %v253 = vld [vmem:[%s0 + $0xe9] sm:$0x1]
  %v254 = vld [vmem:[%s0 + $0xea] sm:$0x1]
  %v255 = vld [vmem:[%s0 + $0xeb] sm:$0x1]
  %v256 = vld [vmem:[%s0 + $0xec] sm:$0x1]
  %v257 = vld [vmem:[%s0 + $0xed] sm:$0x1]
  %v258 = vld [vmem:[%s0 + $0xee] sm:$0x1]
  %v259 = vld [vmem:[%s0 + $0xef] sm:$0x1]
  %v260 = vld [vmem:[%s0 + $0xf0] sm:$0x1]
  %v261 = vld [vmem:[%s0 + $0xf1] sm:$0x1]
  %v262 = vld [vmem:[%s0 + $0xf2] sm:$0x1]
  %v263 = vld [vmem:[%s0 + $0xf3] sm:$0x1]
  %v264 = vld [vmem:[%s0 + $0xf4] sm:$0x1]
  %v265 = vld [vmem:[%s0 + $0xf5] sm:$0x1]
  %v266 = vld [vmem:[%s0 + $0xf6] sm:$0x1]
  %v267 = vld [vmem:[%s0 + $0xf7] sm:$0x1]
  %v268 = vld [vmem:[%s0 + $0xf8] sm:$0x1]
  %v269 = vld [vmem:[%s0 + $0xf9] sm:$0x1]
  %v270 = vld [vmem:[%s0 + $0xfa] sm:$0x1]
  %v271 = vld [vmem:[%s0 + $0xfb] sm:$0x1]
  %v272 = vld [vmem:[%s0 + $0xfc] sm:$0x1]
  %v273 = vld [vmem:[%s0 + $0xfd] sm:$0x1]
  %v274 = vld [vmem:[%s0 + $0xfe] sm:$0x1]
  %v275 = vld [vmem:[%s0 + $0xff] sm:$0x1]
  %v276 = vld [vmem:[%s1] sm:$0xff]
  %v277 = vld [vmem:[%s1 + $0x8] sm:$0xff]
  %v278 = vld [vmem:[%s1 + $0x10] sm:$0xff]
  %v279 = vld [vmem:[%s1 + $0x18] sm:$0xff]
  %v280 = vld [vmem:[%s2] sm:$0x1]
  %v282 = vlaneseq
  %v283 = vshrl.u32 %v282, 7
  %v284 = vsub.s32 0, %v283
  %v285 = vrot.slane %v280, %v284
  %v543 = vcombine.low %v20, %v21
  %v544 = vcombine.low %v22, %v23
  %v545 = vcombine.low %v24, %v25
  %v546 = vcombine.low %v26, %v27
  %v548 = vunpack.c.l.s4 1966171168
  %v549 = vunpack.c.0.s8 %v548
  %v550 = vlaneseq
  %v551 = vshrl.u32 %v550, 7
  %v552 = vsub.s32 %v549, %v551
  %v553 = vrot.slane %v543, %v552
  %v555 = vunpack.c.l.s4 1966171168
  %v556 = vunpack.c.0.s8 %v555
  %v557 = vlaneseq
  %v558 = vshrl.u32 %v557, 7
  %v559 = vsub.s32 %v556, %v558
  %v560 = vrot.slane %v544, %v559
  %v562 = vunpack.c.l.s4 1966171168
  %v563 = vunpack.c.0.s8 %v562
  %v564 = vlaneseq
  %v565 = vshrl.u32 %v564, 7
  %v566 = vsub.s32 %v563, %v565
  %v567 = vrot.slane %v545, %v566
  %v569 = vunpack.c.l.s4 1966171168
  %v570 = vunpack.c.0.s8 %v569
  %v571 = vlaneseq
  %v572 = vshrl.u32 %v571, 7
  %v573 = vsub.s32 %v570, %v572
  %v574 = vrot.slane %v546, %v573
  %v575 = vcombine.low %v553, %v560
  %v576 = vcombine.low %v567, %v574
  %v578 = vunpack.c.l.s4 1966171168
  %v579 = vunpack.c.0.s8 %v578
  %v580 = vlaneseq
  %v581 = vshrl.u32 %v580, 7
  %v582 = vsub.s32 %v579, %v581
  %v583 = vrot.slane %v575, %v582
  %v585 = vunpack.c.l.s4 1966171168
  %v586 = vunpack.c.0.s8 %v585
  %v587 = vlaneseq
  %v588 = vshrl.u32 %v587, 7
  %v589 = vsub.s32 %v586, %v588
  %v590 = vrot.slane %v576, %v589
  %v591 = vcombine.low %v583, %v590
  %v592 = vcombine.low %v28, %v29
  %v593 = vcombine.low %v30, %v31
  %v594 = vcombine.low %v32, %v33
  %v595 = vcombine.low %v34, %v35
  %v597 = vunpack.c.l.s4 1966171168
  %v598 = vunpack.c.0.s8 %v597
  %v599 = vlaneseq
  %v600 = vshrl.u32 %v599, 7
  %v601 = vsub.s32 %v598, %v600
  %v602 = vrot.slane %v592, %v601
  %v604 = vunpack.c.l.s4 1966171168
  %v605 = vunpack.c.0.s8 %v604
  %v606 = vlaneseq
  %v607 = vshrl.u32 %v606, 7
  %v608 = vsub.s32 %v605, %v607
  %v609 = vrot.slane %v593, %v608
  %v611 = vunpack.c.l.s4 1966171168
  %v612 = vunpack.c.0.s8 %v611
  %v613 = vlaneseq
  %v614 = vshrl.u32 %v613, 7
  %v615 = vsub.s32 %v612, %v614
  %v616 = vrot.slane %v594, %v615
  %v618 = vunpack.c.l.s4 1966171168
  %v619 = vunpack.c.0.s8 %v618
  %v620 = vlaneseq
  %v621 = vshrl.u32 %v620, 7
  %v622 = vsub.s32 %v619, %v621
  %v623 = vrot.slane %v595, %v622
  %v624 = vcombine.low %v602, %v609
  %v625 = vcombine.low %v616, %v623
  %v627 = vunpack.c.l.s4 1966171168
  %v628 = vunpack.c.0.s8 %v627
  %v629 = vlaneseq
  %v630 = vshrl.u32 %v629, 7
  %v631 = vsub.s32 %v628, %v630
  %v632 = vrot.slane %v624, %v631
  %v634 = vunpack.c.l.s4 1966171168
  %v635 = vunpack.c.0.s8 %v634
  %v636 = vlaneseq
  %v637 = vshrl.u32 %v636, 7
  %v638 = vsub.s32 %v635, %v637
  %v639 = vrot.slane %v625, %v638
  %v640 = vcombine.low %v632, %v639
  %v641 = vcombine.low %v36, %v37
  %v642 = vcombine.low %v38, %v39
  %v643 = vcombine.low %v40, %v41
  %v644 = vcombine.low %v42, %v43
  %v646 = vunpack.c.l.s4 1966171168
  %v647 = vunpack.c.0.s8 %v646
  %v648 = vlaneseq
  %v649 = vshrl.u32 %v648, 7
  %v650 = vsub.s32 %v647, %v649
  %v651 = vrot.slane %v641, %v650
  %v653 = vunpack.c.l.s4 1966171168
  %v654 = vunpack.c.0.s8 %v653
  %v655 = vlaneseq
  %v656 = vshrl.u32 %v655, 7
  %v657 = vsub.s32 %v654, %v656
  %v658 = vrot.slane %v642, %v657
  %v660 = vunpack.c.l.s4 1966171168
  %v661 = vunpack.c.0.s8 %v660
  %v662 = vlaneseq
  %v663 = vshrl.u32 %v662, 7
  %v664 = vsub.s32 %v661, %v663
  %v665 = vrot.slane %v643, %v664
  %v667 = vunpack.c.l.s4 1966171168
  %v668 = vunpack.c.0.s8 %v667
  %v669 = vlaneseq
  %v670 = vshrl.u32 %v669, 7
  %v671 = vsub.s32 %v668, %v670
  %v672 = vrot.slane %v644, %v671
  %v673 = vcombine.low %v651, %v658
  %v674 = vcombine.low %v665, %v672
  %v676 = vunpack.c.l.s4 1966171168
  %v677 = vunpack.c.0.s8 %v676
  %v678 = vlaneseq
  %v679 = vshrl.u32 %v678, 7
  %v680 = vsub.s32 %v677, %v679
  %v681 = vrot.slane %v673, %v680
  %v683 = vunpack.c.l.s4 1966171168
  %v684 = vunpack.c.0.s8 %v683
  %v685 = vlaneseq
  %v686 = vshrl.u32 %v685, 7
  %v687 = vsub.s32 %v684, %v686
  %v688 = vrot.slane %v674, %v687
  %v689 = vcombine.low %v681, %v688
  %v690 = vcombine.low %v44, %v45
  %v691 = vcombine.low %v46, %v47
  %v692 = vcombine.low %v48, %v49
  %v693 = vcombine.low %v50, %v51
  %v695 = vunpack.c.l.s4 1966171168
  %v696 = vunpack.c.0.s8 %v695
  %v697 = vlaneseq
  %v698 = vshrl.u32 %v697, 7
  %v699 = vsub.s32 %v696, %v698
  %v700 = vrot.slane %v690, %v699
  %v702 = vunpack.c.l.s4 1966171168
  %v703 = vunpack.c.0.s8 %v702
  %v704 = vlaneseq
  %v705 = vshrl.u32 %v704, 7
  %v706 = vsub.s32 %v703, %v705
  %v707 = vrot.slane %v691, %v706
  %v709 = vunpack.c.l.s4 1966171168
  %v710 = vunpack.c.0.s8 %v709
  %v711 = vlaneseq
  %v712 = vshrl.u32 %v711, 7
  %v713 = vsub.s32 %v710, %v712
  %v714 = vrot.slane %v692, %v713
  %v716 = vunpack.c.l.s4 1966171168
  %v717 = vunpack.c.0.s8 %v716
  %v718 = vlaneseq
  %v719 = vshrl.u32 %v718, 7
  %v720 = vsub.s32 %v717, %v719
  %v721 = vrot.slane %v693, %v720
  %v722 = vcombine.low %v700, %v707
  %v723 = vcombine.low %v714, %v721
  %v725 = vunpack.c.l.s4 1966171168
  %v726 = vunpack.c.0.s8 %v725
  %v727 = vlaneseq
  %v728 = vshrl.u32 %v727, 7
  %v729 = vsub.s32 %v726, %v728
  %v730 = vrot.slane %v722, %v729
  %v732 = vunpack.c.l.s4 1966171168
  %v733 = vunpack.c.0.s8 %v732
  %v734 = vlaneseq
  %v735 = vshrl.u32 %v734, 7
  %v736 = vsub.s32 %v733, %v735
  %v737 = vrot.slane %v723, %v736
  %v738 = vcombine.low %v730, %v737
  %v739 = vcombine.low %v52, %v53
  %v740 = vcombine.low %v54, %v55
  %v741 = vcombine.low %v56, %v57
  %v742 = vcombine.low %v58, %v59
  %v744 = vunpack.c.l.s4 1966171168
  %v745 = vunpack.c.0.s8 %v744
  %v746 = vlaneseq
  %v747 = vshrl.u32 %v746, 7
  %v748 = vsub.s32 %v745, %v747
  %v749 = vrot.slane %v739, %v748
  %v751 = vunpack.c.l.s4 1966171168
  %v752 = vunpack.c.0.s8 %v751
  %v753 = vlaneseq
  %v754 = vshrl.u32 %v753, 7
  %v755 = vsub.s32 %v752, %v754
  %v756 = vrot.slane %v740, %v755
  %v758 = vunpack.c.l.s4 1966171168
  %v759 = vunpack.c.0.s8 %v758
  %v760 = vlaneseq
  %v761 = vshrl.u32 %v760, 7
  %v762 = vsub.s32 %v759, %v761
  %v763 = vrot.slane %v741, %v762
  %v765 = vunpack.c.l.s4 1966171168
  %v766 = vunpack.c.0.s8 %v765
  %v767 = vlaneseq
  %v768 = vshrl.u32 %v767, 7
  %v769 = vsub.s32 %v766, %v768
  %v770 = vrot.slane %v742, %v769
  %v771 = vcombine.low %v749, %v756
  %v772 = vcombine.low %v763, %v770
  %v774 = vunpack.c.l.s4 1966171168
  %v775 = vunpack.c.0.s8 %v774
  %v776 = vlaneseq
  %v777 = vshrl.u32 %v776, 7
  %v778 = vsub.s32 %v775, %v777
  %v779 = vrot.slane %v771, %v778
  %v781 = vunpack.c.l.s4 1966171168
  %v782 = vunpack.c.0.s8 %v781
  %v783 = vlaneseq
  %v784 = vshrl.u32 %v783, 7
  %v785 = vsub.s32 %v782, %v784
  %v786 = vrot.slane %v772, %v785
  %v787 = vcombine.low %v779, %v786
  %v788 = vcombine.low %v60, %v61
  %v789 = vcombine.low %v62, %v63
  %v790 = vcombine.low %v64, %v65
  %v791 = vcombine.low %v66, %v67
  %v793 = vunpack.c.l.s4 1966171168
  %v794 = vunpack.c.0.s8 %v793
  %v795 = vlaneseq
  %v796 = vshrl.u32 %v795, 7
  %v797 = vsub.s32 %v794, %v796
  %v798 = vrot.slane %v788, %v797
  %v800 = vunpack.c.l.s4 1966171168
  %v801 = vunpack.c.0.s8 %v800
  %v802 = vlaneseq
  %v803 = vshrl.u32 %v802, 7
  %v804 = vsub.s32 %v801, %v803
  %v805 = vrot.slane %v789, %v804
  %v807 = vunpack.c.l.s4 1966171168
  %v808 = vunpack.c.0.s8 %v807
  %v809 = vlaneseq
  %v810 = vshrl.u32 %v809, 7
  %v811 = vsub.s32 %v808, %v810
  %v812 = vrot.slane %v790, %v811
  %v814 = vunpack.c.l.s4 1966171168
  %v815 = vunpack.c.0.s8 %v814
  %v816 = vlaneseq
  %v817 = vshrl.u32 %v816, 7
  %v818 = vsub.s32 %v815, %v817
  %v819 = vrot.slane %v791, %v818
  %v820 = vcombine.low %v798, %v805
  %v821 = vcombine.low %v812, %v819
  %v823 = vunpack.c.l.s4 1966171168
  %v824 = vunpack.c.0.s8 %v823
  %v825 = vlaneseq
  %v826 = vshrl.u32 %v825, 7
  %v827 = vsub.s32 %v824, %v826
  %v828 = vrot.slane %v820, %v827
  %v830 = vunpack.c.l.s4 1966171168
  %v831 = vunpack.c.0.s8 %v830
  %v832 = vlaneseq
  %v833 = vshrl.u32 %v832, 7
  %v834 = vsub.s32 %v831, %v833
  %v835 = vrot.slane %v821, %v834
  %v836 = vcombine.low %v828, %v835
  %v837 = vcombine.low %v68, %v69
  %v838 = vcombine.low %v70, %v71
  %v839 = vcombine.low %v72, %v73
  %v840 = vcombine.low %v74, %v75
  %v842 = vunpack.c.l.s4 1966171168
  %v843 = vunpack.c.0.s8 %v842
  %v844 = vlaneseq
  %v845 = vshrl.u32 %v844, 7
  %v846 = vsub.s32 %v843, %v845
  %v847 = vrot.slane %v837, %v846
  %v849 = vunpack.c.l.s4 1966171168
  %v850 = vunpack.c.0.s8 %v849
  %v851 = vlaneseq
  %v852 = vshrl.u32 %v851, 7
  %v853 = vsub.s32 %v850, %v852
  %v854 = vrot.slane %v838, %v853
  %v856 = vunpack.c.l.s4 1966171168
  %v857 = vunpack.c.0.s8 %v856
  %v858 = vlaneseq
  %v859 = vshrl.u32 %v858, 7
  %v860 = vsub.s32 %v857, %v859
  %v861 = vrot.slane %v839, %v860
  %v863 = vunpack.c.l.s4 1966171168
  %v864 = vunpack.c.0.s8 %v863
  %v865 = vlaneseq
  %v866 = vshrl.u32 %v865, 7
  %v867 = vsub.s32 %v864, %v866
  %v868 = vrot.slane %v840, %v867
  %v869 = vcombine.low %v847, %v854
  %v870 = vcombine.low %v861, %v868
  %v872 = vunpack.c.l.s4 1966171168
  %v873 = vunpack.c.0.s8 %v872
  %v874 = vlaneseq
  %v875 = vshrl.u32 %v874, 7
  %v876 = vsub.s32 %v873, %v875
  %v877 = vrot.slane %v869, %v876
  %v879 = vunpack.c.l.s4 1966171168
  %v880 = vunpack.c.0.s8 %v879
  %v881 = vlaneseq
  %v882 = vshrl.u32 %v881, 7
  %v883 = vsub.s32 %v880, %v882
  %v884 = vrot.slane %v870, %v883
  %v885 = vcombine.low %v877, %v884
  %v886 = vcombine.low %v76, %v77
  %v887 = vcombine.low %v78, %v79
  %v888 = vcombine.low %v80, %v81
  %v889 = vcombine.low %v82, %v83
  %v891 = vunpack.c.l.s4 1966171168
  %v892 = vunpack.c.0.s8 %v891
  %v893 = vlaneseq
  %v894 = vshrl.u32 %v893, 7
  %v895 = vsub.s32 %v892, %v894
  %v896 = vrot.slane %v886, %v895
  %v898 = vunpack.c.l.s4 1966171168
  %v899 = vunpack.c.0.s8 %v898
  %v900 = vlaneseq
  %v901 = vshrl.u32 %v900, 7
  %v902 = vsub.s32 %v899, %v901
  %v903 = vrot.slane %v887, %v902
  %v905 = vunpack.c.l.s4 1966171168
  %v906 = vunpack.c.0.s8 %v905
  %v907 = vlaneseq
  %v908 = vshrl.u32 %v907, 7
  %v909 = vsub.s32 %v906, %v908
  %v910 = vrot.slane %v888, %v909
  %v912 = vunpack.c.l.s4 1966171168
  %v913 = vunpack.c.0.s8 %v912
  %v914 = vlaneseq
  %v915 = vshrl.u32 %v914, 7
  %v916 = vsub.s32 %v913, %v915
  %v917 = vrot.slane %v889, %v916
  %v918 = vcombine.low %v896, %v903
  %v919 = vcombine.low %v910, %v917
  %v921 = vunpack.c.l.s4 1966171168
  %v922 = vunpack.c.0.s8 %v921
  %v923 = vlaneseq
  %v924 = vshrl.u32 %v923, 7
  %v925 = vsub.s32 %v922, %v924
  %v926 = vrot.slane %v918, %v925
  %v928 = vunpack.c.l.s4 1966171168
  %v929 = vunpack.c.0.s8 %v928
  %v930 = vlaneseq
  %v931 = vshrl.u32 %v930, 7
  %v932 = vsub.s32 %v929, %v931
  %v933 = vrot.slane %v919, %v932
  %v934 = vcombine.low %v926, %v933
  %v935 = vcombine.low %v84, %v85
  %v936 = vcombine.low %v86, %v87
  %v937 = vcombine.low %v88, %v89
  %v938 = vcombine.low %v90, %v91
  %v940 = vunpack.c.l.s4 1966171168
  %v941 = vunpack.c.0.s8 %v940
  %v942 = vlaneseq
  %v943 = vshrl.u32 %v942, 7
  %v944 = vsub.s32 %v941, %v943
  %v945 = vrot.slane %v935, %v944
  %v947 = vunpack.c.l.s4 1966171168
  %v948 = vunpack.c.0.s8 %v947
  %v949 = vlaneseq
  %v950 = vshrl.u32 %v949, 7
  %v951 = vsub.s32 %v948, %v950
  %v952 = vrot.slane %v936, %v951
  %v954 = vunpack.c.l.s4 1966171168
  %v955 = vunpack.c.0.s8 %v954
  %v956 = vlaneseq
  %v957 = vshrl.u32 %v956, 7
  %v958 = vsub.s32 %v955, %v957
  %v959 = vrot.slane %v937, %v958
  %v961 = vunpack.c.l.s4 1966171168
  %v962 = vunpack.c.0.s8 %v961
  %v963 = vlaneseq
  %v964 = vshrl.u32 %v963, 7
  %v965 = vsub.s32 %v962, %v964
  %v966 = vrot.slane %v938, %v965
  %v967 = vcombine.low %v945, %v952
  %v968 = vcombine.low %v959, %v966
  %v970 = vunpack.c.l.s4 1966171168
  %v971 = vunpack.c.0.s8 %v970
  %v972 = vlaneseq
  %v973 = vshrl.u32 %v972, 7
  %v974 = vsub.s32 %v971, %v973
  %v975 = vrot.slane %v967, %v974
  %v977 = vunpack.c.l.s4 1966171168
  %v978 = vunpack.c.0.s8 %v977
  %v979 = vlaneseq
  %v980 = vshrl.u32 %v979, 7
  %v981 = vsub.s32 %v978, %v980
  %v982 = vrot.slane %v968, %v981
  %v983 = vcombine.low %v975, %v982
  %v984 = vcombine.low %v92, %v93
  %v985 = vcombine.low %v94, %v95
  %v986 = vcombine.low %v96, %v97
  %v987 = vcombine.low %v98, %v99
  %v989 = vunpack.c.l.s4 1966171168
  %v990 = vunpack.c.0.s8 %v989
  %v991 = vlaneseq
  %v992 = vshrl.u32 %v991, 7
  %v993 = vsub.s32 %v990, %v992
  %v994 = vrot.slane %v984, %v993
  %v996 = vunpack.c.l.s4 1966171168
  %v997 = vunpack.c.0.s8 %v996
  %v998 = vlaneseq
  %v999 = vshrl.u32 %v998, 7
  %v1000 = vsub.s32 %v997, %v999
  %v1001 = vrot.slane %v985, %v1000
  %v1003 = vunpack.c.l.s4 1966171168
  %v1004 = vunpack.c.0.s8 %v1003
  %v1005 = vlaneseq
  %v1006 = vshrl.u32 %v1005, 7
  %v1007 = vsub.s32 %v1004, %v1006
  %v1008 = vrot.slane %v986, %v1007
  %v1010 = vunpack.c.l.s4 1966171168
  %v1011 = vunpack.c.0.s8 %v1010
  %v1012 = vlaneseq
  %v1013 = vshrl.u32 %v1012, 7
  %v1014 = vsub.s32 %v1011, %v1013
  %v1015 = vrot.slane %v987, %v1014
  %v1016 = vcombine.low %v994, %v1001
  %v1017 = vcombine.low %v1008, %v1015
  %v1019 = vunpack.c.l.s4 1966171168
  %v1020 = vunpack.c.0.s8 %v1019
  %v1021 = vlaneseq
  %v1022 = vshrl.u32 %v1021, 7
  %v1023 = vsub.s32 %v1020, %v1022
  %v1024 = vrot.slane %v1016, %v1023
  %v1026 = vunpack.c.l.s4 1966171168
  %v1027 = vunpack.c.0.s8 %v1026
  %v1028 = vlaneseq
  %v1029 = vshrl.u32 %v1028, 7
  %v1030 = vsub.s32 %v1027, %v1029
  %v1031 = vrot.slane %v1017, %v1030
  %v1032 = vcombine.low %v1024, %v1031
  %v1033 = vcombine.low %v100, %v101
  %v1034 = vcombine.low %v102, %v103
  %v1035 = vcombine.low %v104, %v105
  %v1036 = vcombine.low %v106, %v107
  %v1038 = vunpack.c.l.s4 1966171168
  %v1039 = vunpack.c.0.s8 %v1038
  %v1040 = vlaneseq
  %v1041 = vshrl.u32 %v1040, 7
  %v1042 = vsub.s32 %v1039, %v1041
  %v1043 = vrot.slane %v1033, %v1042
  %v1045 = vunpack.c.l.s4 1966171168
  %v1046 = vunpack.c.0.s8 %v1045
  %v1047 = vlaneseq
  %v1048 = vshrl.u32 %v1047, 7
  %v1049 = vsub.s32 %v1046, %v1048
  %v1050 = vrot.slane %v1034, %v1049
  %v1052 = vunpack.c.l.s4 1966171168
  %v1053 = vunpack.c.0.s8 %v1052
  %v1054 = vlaneseq
  %v1055 = vshrl.u32 %v1054, 7
  %v1056 = vsub.s32 %v1053, %v1055
  %v1057 = vrot.slane %v1035, %v1056
  %v1059 = vunpack.c.l.s4 1966171168
  %v1060 = vunpack.c.0.s8 %v1059
  %v1061 = vlaneseq
  %v1062 = vshrl.u32 %v1061, 7
  %v1063 = vsub.s32 %v1060, %v1062
  %v1064 = vrot.slane %v1036, %v1063
  %v1065 = vcombine.low %v1043, %v1050
  %v1066 = vcombine.low %v1057, %v1064
  %v1068 = vunpack.c.l.s4 1966171168
  %v1069 = vunpack.c.0.s8 %v1068
  %v1070 = vlaneseq
  %v1071 = vshrl.u32 %v1070, 7
  %v1072 = vsub.s32 %v1069, %v1071
  %v1073 = vrot.slane %v1065, %v1072
  %v1075 = vunpack.c.l.s4 1966171168
  %v1076 = vunpack.c.0.s8 %v1075
  %v1077 = vlaneseq
  %v1078 = vshrl.u32 %v1077, 7
  %v1079 = vsub.s32 %v1076, %v1078
  %v1080 = vrot.slane %v1066, %v1079
  %v1081 = vcombine.low %v1073, %v1080
  %v1082 = vcombine.low %v108, %v109
  %v1083 = vcombine.low %v110, %v111
  %v1084 = vcombine.low %v112, %v113
  %v1085 = vcombine.low %v114, %v115
  %v1087 = vunpack.c.l.s4 1966171168
  %v1088 = vunpack.c.0.s8 %v1087
  %v1089 = vlaneseq
  %v1090 = vshrl.u32 %v1089, 7
  %v1091 = vsub.s32 %v1088, %v1090
  %v1092 = vrot.slane %v1082, %v1091
  %v1094 = vunpack.c.l.s4 1966171168
  %v1095 = vunpack.c.0.s8 %v1094
  %v1096 = vlaneseq
  %v1097 = vshrl.u32 %v1096, 7
  %v1098 = vsub.s32 %v1095, %v1097
  %v1099 = vrot.slane %v1083, %v1098
  %v1101 = vunpack.c.l.s4 1966171168
  %v1102 = vunpack.c.0.s8 %v1101
  %v1103 = vlaneseq
  %v1104 = vshrl.u32 %v1103, 7
  %v1105 = vsub.s32 %v1102, %v1104
  %v1106 = vrot.slane %v1084, %v1105
  %v1108 = vunpack.c.l.s4 1966171168
  %v1109 = vunpack.c.0.s8 %v1108
  %v1110 = vlaneseq
  %v1111 = vshrl.u32 %v1110, 7
  %v1112 = vsub.s32 %v1109, %v1111
  %v1113 = vrot.slane %v1085, %v1112
  %v1114 = vcombine.low %v1092, %v1099
  %v1115 = vcombine.low %v1106, %v1113
  %v1117 = vunpack.c.l.s4 1966171168
  %v1118 = vunpack.c.0.s8 %v1117
  %v1119 = vlaneseq
  %v1120 = vshrl.u32 %v1119, 7
  %v1121 = vsub.s32 %v1118, %v1120
  %v1122 = vrot.slane %v1114, %v1121
  %v1124 = vunpack.c.l.s4 1966171168
  %v1125 = vunpack.c.0.s8 %v1124
  %v1126 = vlaneseq
  %v1127 = vshrl.u32 %v1126, 7
  %v1128 = vsub.s32 %v1125, %v1127
  %v1129 = vrot.slane %v1115, %v1128
  %v1130 = vcombine.low %v1122, %v1129
  %v1131 = vcombine.low %v116, %v117
  %v1132 = vcombine.low %v118, %v119
  %v1133 = vcombine.low %v120, %v121
  %v1134 = vcombine.low %v122, %v123
  %v1136 = vunpack.c.l.s4 1966171168
  %v1137 = vunpack.c.0.s8 %v1136
  %v1138 = vlaneseq
  %v1139 = vshrl.u32 %v1138, 7
  %v1140 = vsub.s32 %v1137, %v1139
  %v1141 = vrot.slane %v1131, %v1140
  %v1143 = vunpack.c.l.s4 1966171168
  %v1144 = vunpack.c.0.s8 %v1143
  %v1145 = vlaneseq
  %v1146 = vshrl.u32 %v1145, 7
  %v1147 = vsub.s32 %v1144, %v1146
  %v1148 = vrot.slane %v1132, %v1147
  %v1150 = vunpack.c.l.s4 1966171168
  %v1151 = vunpack.c.0.s8 %v1150
  %v1152 = vlaneseq
  %v1153 = vshrl.u32 %v1152, 7
  %v1154 = vsub.s32 %v1151, %v1153
  %v1155 = vrot.slane %v1133, %v1154
  %v1157 = vunpack.c.l.s4 1966171168
  %v1158 = vunpack.c.0.s8 %v1157
  %v1159 = vlaneseq
  %v1160 = vshrl.u32 %v1159, 7
  %v1161 = vsub.s32 %v1158, %v1160
  %v1162 = vrot.slane %v1134, %v1161
  %v1163 = vcombine.low %v1141, %v1148
  %v1164 = vcombine.low %v1155, %v1162
  %v1166 = vunpack.c.l.s4 1966171168
  %v1167 = vunpack.c.0.s8 %v1166
  %v1168 = vlaneseq
  %v1169 = vshrl.u32 %v1168, 7
  %v1170 = vsub.s32 %v1167, %v1169
  %v1171 = vrot.slane %v1163, %v1170
  %v1173 = vunpack.c.l.s4 1966171168
  %v1174 = vunpack.c.0.s8 %v1173
  %v1175 = vlaneseq
  %v1176 = vshrl.u32 %v1175, 7
  %v1177 = vsub.s32 %v1174, %v1176
  %v1178 = vrot.slane %v1164, %v1177
  %v1179 = vcombine.low %v1171, %v1178
  %v1180 = vcombine.low %v124, %v125
  %v1181 = vcombine.low %v126, %v127
  %v1182 = vcombine.low %v128, %v129
  %v1183 = vcombine.low %v130, %v131
  %v1185 = vunpack.c.l.s4 1966171168
  %v1186 = vunpack.c.0.s8 %v1185
  %v1187 = vlaneseq
  %v1188 = vshrl.u32 %v1187, 7
  %v1189 = vsub.s32 %v1186, %v1188
  %v1190 = vrot.slane %v1180, %v1189
  %v1192 = vunpack.c.l.s4 1966171168
  %v1193 = vunpack.c.0.s8 %v1192
  %v1194 = vlaneseq
  %v1195 = vshrl.u32 %v1194, 7
  %v1196 = vsub.s32 %v1193, %v1195
  %v1197 = vrot.slane %v1181, %v1196
  %v1199 = vunpack.c.l.s4 1966171168
  %v1200 = vunpack.c.0.s8 %v1199
  %v1201 = vlaneseq
  %v1202 = vshrl.u32 %v1201, 7
  %v1203 = vsub.s32 %v1200, %v1202
  %v1204 = vrot.slane %v1182, %v1203
  %v1206 = vunpack.c.l.s4 1966171168
  %v1207 = vunpack.c.0.s8 %v1206
  %v1208 = vlaneseq
  %v1209 = vshrl.u32 %v1208, 7
  %v1210 = vsub.s32 %v1207, %v1209
  %v1211 = vrot.slane %v1183, %v1210
  %v1212 = vcombine.low %v1190, %v1197
  %v1213 = vcombine.low %v1204, %v1211
  %v1215 = vunpack.c.l.s4 1966171168
  %v1216 = vunpack.c.0.s8 %v1215
  %v1217 = vlaneseq
  %v1218 = vshrl.u32 %v1217, 7
  %v1219 = vsub.s32 %v1216, %v1218
  %v1220 = vrot.slane %v1212, %v1219
  %v1222 = vunpack.c.l.s4 1966171168
  %v1223 = vunpack.c.0.s8 %v1222
  %v1224 = vlaneseq
  %v1225 = vshrl.u32 %v1224, 7
  %v1226 = vsub.s32 %v1223, %v1225
  %v1227 = vrot.slane %v1213, %v1226
  %v1228 = vcombine.low %v1220, %v1227
  %v1229 = vcombine.low %v132, %v133
  %v1230 = vcombine.low %v134, %v135
  %v1231 = vcombine.low %v136, %v137
  %v1232 = vcombine.low %v138, %v139
  %v1234 = vunpack.c.l.s4 1966171168
  %v1235 = vunpack.c.0.s8 %v1234
  %v1236 = vlaneseq
  %v1237 = vshrl.u32 %v1236, 7
  %v1238 = vsub.s32 %v1235, %v1237
  %v1239 = vrot.slane %v1229, %v1238
  %v1241 = vunpack.c.l.s4 1966171168
  %v1242 = vunpack.c.0.s8 %v1241
  %v1243 = vlaneseq
  %v1244 = vshrl.u32 %v1243, 7
  %v1245 = vsub.s32 %v1242, %v1244
  %v1246 = vrot.slane %v1230, %v1245
  %v1248 = vunpack.c.l.s4 1966171168
  %v1249 = vunpack.c.0.s8 %v1248
  %v1250 = vlaneseq
  %v1251 = vshrl.u32 %v1250, 7
  %v1252 = vsub.s32 %v1249, %v1251
  %v1253 = vrot.slane %v1231, %v1252
  %v1255 = vunpack.c.l.s4 1966171168
  %v1256 = vunpack.c.0.s8 %v1255
  %v1257 = vlaneseq
  %v1258 = vshrl.u32 %v1257, 7
  %v1259 = vsub.s32 %v1256, %v1258
  %v1260 = vrot.slane %v1232, %v1259
  %v1261 = vcombine.low %v1239, %v1246
  %v1262 = vcombine.low %v1253, %v1260
  %v1264 = vunpack.c.l.s4 1966171168
  %v1265 = vunpack.c.0.s8 %v1264
  %v1266 = vlaneseq
  %v1267 = vshrl.u32 %v1266, 7
  %v1268 = vsub.s32 %v1265, %v1267
  %v1269 = vrot.slane %v1261, %v1268
  %v1271 = vunpack.c.l.s4 1966171168
  %v1272 = vunpack.c.0.s8 %v1271
  %v1273 = vlaneseq
  %v1274 = vshrl.u32 %v1273, 7
  %v1275 = vsub.s32 %v1272, %v1274
  %v1276 = vrot.slane %v1262, %v1275
  %v1277 = vcombine.low %v1269, %v1276
  %v1278 = vcombine.low %v140, %v141
  %v1279 = vcombine.low %v142, %v143
  %v1280 = vcombine.low %v144, %v145
  %v1281 = vcombine.low %v146, %v147
  %v1283 = vunpack.c.l.s4 1966171168
  %v1284 = vunpack.c.0.s8 %v1283
  %v1285 = vlaneseq
  %v1286 = vshrl.u32 %v1285, 7
  %v1287 = vsub.s32 %v1284, %v1286
  %v1288 = vrot.slane %v1278, %v1287
  %v1290 = vunpack.c.l.s4 1966171168
  %v1291 = vunpack.c.0.s8 %v1290
  %v1292 = vlaneseq
  %v1293 = vshrl.u32 %v1292, 7
  %v1294 = vsub.s32 %v1291, %v1293
  %v1295 = vrot.slane %v1279, %v1294
  %v1297 = vunpack.c.l.s4 1966171168
  %v1298 = vunpack.c.0.s8 %v1297
  %v1299 = vlaneseq
  %v1300 = vshrl.u32 %v1299, 7
  %v1301 = vsub.s32 %v1298, %v1300
  %v1302 = vrot.slane %v1280, %v1301
  %v1304 = vunpack.c.l.s4 1966171168
  %v1305 = vunpack.c.0.s8 %v1304
  %v1306 = vlaneseq
  %v1307 = vshrl.u32 %v1306, 7
  %v1308 = vsub.s32 %v1305, %v1307
  %v1309 = vrot.slane %v1281, %v1308
  %v1310 = vcombine.low %v1288, %v1295
  %v1311 = vcombine.low %v1302, %v1309
  %v1313 = vunpack.c.l.s4 1966171168
  %v1314 = vunpack.c.0.s8 %v1313
  %v1315 = vlaneseq
  %v1316 = vshrl.u32 %v1315, 7
  %v1317 = vsub.s32 %v1314, %v1316
  %v1318 = vrot.slane %v1310, %v1317
  %v1320 = vunpack.c.l.s4 1966171168
  %v1321 = vunpack.c.0.s8 %v1320
  %v1322 = vlaneseq
  %v1323 = vshrl.u32 %v1322, 7
  %v1324 = vsub.s32 %v1321, %v1323
  %v1325 = vrot.slane %v1311, %v1324
  %v1326 = vcombine.low %v1318, %v1325
  %v1327 = vcombine.low %v148, %v149
  %v1328 = vcombine.low %v150, %v151
  %v1329 = vcombine.low %v152, %v153
  %v1330 = vcombine.low %v154, %v155
  %v1332 = vunpack.c.l.s4 1966171168
  %v1333 = vunpack.c.0.s8 %v1332
  %v1334 = vlaneseq
  %v1335 = vshrl.u32 %v1334, 7
  %v1336 = vsub.s32 %v1333, %v1335
  %v1337 = vrot.slane %v1327, %v1336
  %v1339 = vunpack.c.l.s4 1966171168
  %v1340 = vunpack.c.0.s8 %v1339
  %v1341 = vlaneseq
  %v1342 = vshrl.u32 %v1341, 7
  %v1343 = vsub.s32 %v1340, %v1342
  %v1344 = vrot.slane %v1328, %v1343
  %v1346 = vunpack.c.l.s4 1966171168
  %v1347 = vunpack.c.0.s8 %v1346
  %v1348 = vlaneseq
  %v1349 = vshrl.u32 %v1348, 7
  %v1350 = vsub.s32 %v1347, %v1349
  %v1351 = vrot.slane %v1329, %v1350
  %v1353 = vunpack.c.l.s4 1966171168
  %v1354 = vunpack.c.0.s8 %v1353
  %v1355 = vlaneseq
  %v1356 = vshrl.u32 %v1355, 7
  %v1357 = vsub.s32 %v1354, %v1356
  %v1358 = vrot.slane %v1330, %v1357
  %v1359 = vcombine.low %v1337, %v1344
  %v1360 = vcombine.low %v1351, %v1358
  %v1362 = vunpack.c.l.s4 1966171168
  %v1363 = vunpack.c.0.s8 %v1362
  %v1364 = vlaneseq
  %v1365 = vshrl.u32 %v1364, 7
  %v1366 = vsub.s32 %v1363, %v1365
  %v1367 = vrot.slane %v1359, %v1366
  %v1369 = vunpack.c.l.s4 1966171168
  %v1370 = vunpack.c.0.s8 %v1369
  %v1371 = vlaneseq
  %v1372 = vshrl.u32 %v1371, 7
  %v1373 = vsub.s32 %v1370, %v1372
  %v1374 = vrot.slane %v1360, %v1373
  %v1375 = vcombine.low %v1367, %v1374
  %v1376 = vcombine.low %v156, %v157
  %v1377 = vcombine.low %v158, %v159
  %v1378 = vcombine.low %v160, %v161
  %v1379 = vcombine.low %v162, %v163
  %v1381 = vunpack.c.l.s4 1966171168
  %v1382 = vunpack.c.0.s8 %v1381
  %v1383 = vlaneseq
  %v1384 = vshrl.u32 %v1383, 7
  %v1385 = vsub.s32 %v1382, %v1384
  %v1386 = vrot.slane %v1376, %v1385
  %v1388 = vunpack.c.l.s4 1966171168
  %v1389 = vunpack.c.0.s8 %v1388
  %v1390 = vlaneseq
  %v1391 = vshrl.u32 %v1390, 7
  %v1392 = vsub.s32 %v1389, %v1391
  %v1393 = vrot.slane %v1377, %v1392
  %v1395 = vunpack.c.l.s4 1966171168
  %v1396 = vunpack.c.0.s8 %v1395
  %v1397 = vlaneseq
  %v1398 = vshrl.u32 %v1397, 7
  %v1399 = vsub.s32 %v1396, %v1398
  %v1400 = vrot.slane %v1378, %v1399
  %v1402 = vunpack.c.l.s4 1966171168
  %v1403 = vunpack.c.0.s8 %v1402
  %v1404 = vlaneseq
  %v1405 = vshrl.u32 %v1404, 7
  %v1406 = vsub.s32 %v1403, %v1405
  %v1407 = vrot.slane %v1379, %v1406
  %v1408 = vcombine.low %v1386, %v1393
  %v1409 = vcombine.low %v1400, %v1407
  %v1411 = vunpack.c.l.s4 1966171168
  %v1412 = vunpack.c.0.s8 %v1411
  %v1413 = vlaneseq
  %v1414 = vshrl.u32 %v1413, 7
  %v1415 = vsub.s32 %v1412, %v1414
  %v1416 = vrot.slane %v1408, %v1415
  %v1418 = vunpack.c.l.s4 1966171168
  %v1419 = vunpack.c.0.s8 %v1418
  %v1420 = vlaneseq
  %v1421 = vshrl.u32 %v1420, 7
  %v1422 = vsub.s32 %v1419, %v1421
  %v1423 = vrot.slane %v1409, %v1422
  %v1424 = vcombine.low %v1416, %v1423
  %v1425 = vcombine.low %v164, %v165
  %v1426 = vcombine.low %v166, %v167
  %v1427 = vcombine.low %v168, %v169
  %v1428 = vcombine.low %v170, %v171
  %v1430 = vunpack.c.l.s4 1966171168
  %v1431 = vunpack.c.0.s8 %v1430
  %v1432 = vlaneseq
  %v1433 = vshrl.u32 %v1432, 7
  %v1434 = vsub.s32 %v1431, %v1433
  %v1435 = vrot.slane %v1425, %v1434
  %v1437 = vunpack.c.l.s4 1966171168
  %v1438 = vunpack.c.0.s8 %v1437
  %v1439 = vlaneseq
  %v1440 = vshrl.u32 %v1439, 7
  %v1441 = vsub.s32 %v1438, %v1440
  %v1442 = vrot.slane %v1426, %v1441
  %v1444 = vunpack.c.l.s4 1966171168
  %v1445 = vunpack.c.0.s8 %v1444
  %v1446 = vlaneseq
  %v1447 = vshrl.u32 %v1446, 7
  %v1448 = vsub.s32 %v1445, %v1447
  %v1449 = vrot.slane %v1427, %v1448
  %v1451 = vunpack.c.l.s4 1966171168
  %v1452 = vunpack.c.0.s8 %v1451
  %v1453 = vlaneseq
  %v1454 = vshrl.u32 %v1453, 7
  %v1455 = vsub.s32 %v1452, %v1454
  %v1456 = vrot.slane %v1428, %v1455
  %v1457 = vcombine.low %v1435, %v1442
  %v1458 = vcombine.low %v1449, %v1456
  %v1460 = vunpack.c.l.s4 1966171168
  %v1461 = vunpack.c.0.s8 %v1460
  %v1462 = vlaneseq
  %v1463 = vshrl.u32 %v1462, 7
  %v1464 = vsub.s32 %v1461, %v1463
  %v1465 = vrot.slane %v1457, %v1464
  %v1467 = vunpack.c.l.s4 1966171168
  %v1468 = vunpack.c.0.s8 %v1467
  %v1469 = vlaneseq
  %v1470 = vshrl.u32 %v1469, 7
  %v1471 = vsub.s32 %v1468, %v1470
  %v1472 = vrot.slane %v1458, %v1471
  %v1473 = vcombine.low %v1465, %v1472
  %v1474 = vcombine.low %v172, %v173
  %v1475 = vcombine.low %v174, %v175
  %v1476 = vcombine.low %v176, %v177
  %v1477 = vcombine.low %v178, %v179
  %v1479 = vunpack.c.l.s4 1966171168
  %v1480 = vunpack.c.0.s8 %v1479
  %v1481 = vlaneseq
  %v1482 = vshrl.u32 %v1481, 7
  %v1483 = vsub.s32 %v1480, %v1482
  %v1484 = vrot.slane %v1474, %v1483
  %v1486 = vunpack.c.l.s4 1966171168
  %v1487 = vunpack.c.0.s8 %v1486
  %v1488 = vlaneseq
  %v1489 = vshrl.u32 %v1488, 7
  %v1490 = vsub.s32 %v1487, %v1489
  %v1491 = vrot.slane %v1475, %v1490
  %v1493 = vunpack.c.l.s4 1966171168
  %v1494 = vunpack.c.0.s8 %v1493
  %v1495 = vlaneseq
  %v1496 = vshrl.u32 %v1495, 7
  %v1497 = vsub.s32 %v1494, %v1496
  %v1498 = vrot.slane %v1476, %v1497
  %v1500 = vunpack.c.l.s4 1966171168
  %v1501 = vunpack.c.0.s8 %v1500
  %v1502 = vlaneseq
  %v1503 = vshrl.u32 %v1502, 7
  %v1504 = vsub.s32 %v1501, %v1503
  %v1505 = vrot.slane %v1477, %v1504
  %v1506 = vcombine.low %v1484, %v1491
  %v1507 = vcombine.low %v1498, %v1505
  %v1509 = vunpack.c.l.s4 1966171168
  %v1510 = vunpack.c.0.s8 %v1509
  %v1511 = vlaneseq
  %v1512 = vshrl.u32 %v1511, 7
  %v1513 = vsub.s32 %v1510, %v1512
  %v1514 = vrot.slane %v1506, %v1513
  %v1516 = vunpack.c.l.s4 1966171168
  %v1517 = vunpack.c.0.s8 %v1516
  %v1518 = vlaneseq
  %v1519 = vshrl.u32 %v1518, 7
  %v1520 = vsub.s32 %v1517, %v1519
  %v1521 = vrot.slane %v1507, %v1520
  %v1522 = vcombine.low %v1514, %v1521
  %v1523 = vcombine.low %v180, %v181
  %v1524 = vcombine.low %v182, %v183
  %v1525 = vcombine.low %v184, %v185
  %v1526 = vcombine.low %v186, %v187
  %v1528 = vunpack.c.l.s4 1966171168
  %v1529 = vunpack.c.0.s8 %v1528
  %v1530 = vlaneseq
  %v1531 = vshrl.u32 %v1530, 7
  %v1532 = vsub.s32 %v1529, %v1531
  %v1533 = vrot.slane %v1523, %v1532
  %v1535 = vunpack.c.l.s4 1966171168
  %v1536 = vunpack.c.0.s8 %v1535
  %v1537 = vlaneseq
  %v1538 = vshrl.u32 %v1537, 7
  %v1539 = vsub.s32 %v1536, %v1538
  %v1540 = vrot.slane %v1524, %v1539
  %v1542 = vunpack.c.l.s4 1966171168
  %v1543 = vunpack.c.0.s8 %v1542
  %v1544 = vlaneseq
  %v1545 = vshrl.u32 %v1544, 7
  %v1546 = vsub.s32 %v1543, %v1545
  %v1547 = vrot.slane %v1525, %v1546
  %v1549 = vunpack.c.l.s4 1966171168
  %v1550 = vunpack.c.0.s8 %v1549
  %v1551 = vlaneseq
  %v1552 = vshrl.u32 %v1551, 7
  %v1553 = vsub.s32 %v1550, %v1552
  %v1554 = vrot.slane %v1526, %v1553
  %v1555 = vcombine.low %v1533, %v1540
  %v1556 = vcombine.low %v1547, %v1554
  %v1558 = vunpack.c.l.s4 1966171168
  %v1559 = vunpack.c.0.s8 %v1558
  %v1560 = vlaneseq
  %v1561 = vshrl.u32 %v1560, 7
  %v1562 = vsub.s32 %v1559, %v1561
  %v1563 = vrot.slane %v1555, %v1562
  %v1565 = vunpack.c.l.s4 1966171168
  %v1566 = vunpack.c.0.s8 %v1565
  %v1567 = vlaneseq
  %v1568 = vshrl.u32 %v1567, 7
  %v1569 = vsub.s32 %v1566, %v1568
  %v1570 = vrot.slane %v1556, %v1569
  %v1571 = vcombine.low %v1563, %v1570
  %v1572 = vcombine.low %v188, %v189
  %v1573 = vcombine.low %v190, %v191
  %v1574 = vcombine.low %v192, %v193
  %v1575 = vcombine.low %v194, %v195
  %v1577 = vunpack.c.l.s4 1966171168
  %v1578 = vunpack.c.0.s8 %v1577
  %v1579 = vlaneseq
  %v1580 = vshrl.u32 %v1579, 7
  %v1581 = vsub.s32 %v1578, %v1580
  %v1582 = vrot.slane %v1572, %v1581
  %v1584 = vunpack.c.l.s4 1966171168
  %v1585 = vunpack.c.0.s8 %v1584
  %v1586 = vlaneseq
  %v1587 = vshrl.u32 %v1586, 7
  %v1588 = vsub.s32 %v1585, %v1587
  %v1589 = vrot.slane %v1573, %v1588
  %v1591 = vunpack.c.l.s4 1966171168
  %v1592 = vunpack.c.0.s8 %v1591
  %v1593 = vlaneseq
  %v1594 = vshrl.u32 %v1593, 7
  %v1595 = vsub.s32 %v1592, %v1594
  %v1596 = vrot.slane %v1574, %v1595
  %v1598 = vunpack.c.l.s4 1966171168
  %v1599 = vunpack.c.0.s8 %v1598
  %v1600 = vlaneseq
  %v1601 = vshrl.u32 %v1600, 7
  %v1602 = vsub.s32 %v1599, %v1601
  %v1603 = vrot.slane %v1575, %v1602
  %v1604 = vcombine.low %v1582, %v1589
  %v1605 = vcombine.low %v1596, %v1603
  %v1607 = vunpack.c.l.s4 1966171168
  %v1608 = vunpack.c.0.s8 %v1607
  %v1609 = vlaneseq
  %v1610 = vshrl.u32 %v1609, 7
  %v1611 = vsub.s32 %v1608, %v1610
  %v1612 = vrot.slane %v1604, %v1611
  %v1614 = vunpack.c.l.s4 1966171168
  %v1615 = vunpack.c.0.s8 %v1614
  %v1616 = vlaneseq
  %v1617 = vshrl.u32 %v1616, 7
  %v1618 = vsub.s32 %v1615, %v1617
  %v1619 = vrot.slane %v1605, %v1618
  %v1620 = vcombine.low %v1612, %v1619
  %v1621 = vcombine.low %v196, %v197
  %v1622 = vcombine.low %v198, %v199
  %v1623 = vcombine.low %v200, %v201
  %v1624 = vcombine.low %v202, %v203
  %v1626 = vunpack.c.l.s4 1966171168
  %v1627 = vunpack.c.0.s8 %v1626
  %v1628 = vlaneseq
  %v1629 = vshrl.u32 %v1628, 7
  %v1630 = vsub.s32 %v1627, %v1629
  %v1631 = vrot.slane %v1621, %v1630
  %v1633 = vunpack.c.l.s4 1966171168
  %v1634 = vunpack.c.0.s8 %v1633
  %v1635 = vlaneseq
  %v1636 = vshrl.u32 %v1635, 7
  %v1637 = vsub.s32 %v1634, %v1636
  %v1638 = vrot.slane %v1622, %v1637
  %v1640 = vunpack.c.l.s4 1966171168
  %v1641 = vunpack.c.0.s8 %v1640
  %v1642 = vlaneseq
  %v1643 = vshrl.u32 %v1642, 7
  %v1644 = vsub.s32 %v1641, %v1643
  %v1645 = vrot.slane %v1623, %v1644
  %v1647 = vunpack.c.l.s4 1966171168
  %v1648 = vunpack.c.0.s8 %v1647
  %v1649 = vlaneseq
  %v1650 = vshrl.u32 %v1649, 7
  %v1651 = vsub.s32 %v1648, %v1650
  %v1652 = vrot.slane %v1624, %v1651
  %v1653 = vcombine.low %v1631, %v1638
  %v1654 = vcombine.low %v1645, %v1652
  %v1656 = vunpack.c.l.s4 1966171168
  %v1657 = vunpack.c.0.s8 %v1656
  %v1658 = vlaneseq
  %v1659 = vshrl.u32 %v1658, 7
  %v1660 = vsub.s32 %v1657, %v1659
  %v1661 = vrot.slane %v1653, %v1660
  %v1663 = vunpack.c.l.s4 1966171168
  %v1664 = vunpack.c.0.s8 %v1663
  %v1665 = vlaneseq
  %v1666 = vshrl.u32 %v1665, 7
  %v1667 = vsub.s32 %v1664, %v1666
  %v1668 = vrot.slane %v1654, %v1667
  %v1669 = vcombine.low %v1661, %v1668
  %v1670 = vcombine.low %v204, %v205
  %v1671 = vcombine.low %v206, %v207
  %v1672 = vcombine.low %v208, %v209
  %v1673 = vcombine.low %v210, %v211
  %v1675 = vunpack.c.l.s4 1966171168
  %v1676 = vunpack.c.0.s8 %v1675
  %v1677 = vlaneseq
  %v1678 = vshrl.u32 %v1677, 7
  %v1679 = vsub.s32 %v1676, %v1678
  %v1680 = vrot.slane %v1670, %v1679
  %v1682 = vunpack.c.l.s4 1966171168
  %v1683 = vunpack.c.0.s8 %v1682
  %v1684 = vlaneseq
  %v1685 = vshrl.u32 %v1684, 7
  %v1686 = vsub.s32 %v1683, %v1685
  %v1687 = vrot.slane %v1671, %v1686
  %v1689 = vunpack.c.l.s4 1966171168
  %v1690 = vunpack.c.0.s8 %v1689
  %v1691 = vlaneseq
  %v1692 = vshrl.u32 %v1691, 7
  %v1693 = vsub.s32 %v1690, %v1692
  %v1694 = vrot.slane %v1672, %v1693
  %v1696 = vunpack.c.l.s4 1966171168
  %v1697 = vunpack.c.0.s8 %v1696
  %v1698 = vlaneseq
  %v1699 = vshrl.u32 %v1698, 7
  %v1700 = vsub.s32 %v1697, %v1699
  %v1701 = vrot.slane %v1673, %v1700
  %v1702 = vcombine.low %v1680, %v1687
  %v1703 = vcombine.low %v1694, %v1701
  %v1705 = vunpack.c.l.s4 1966171168
  %v1706 = vunpack.c.0.s8 %v1705
  %v1707 = vlaneseq
  %v1708 = vshrl.u32 %v1707, 7
  %v1709 = vsub.s32 %v1706, %v1708
  %v1710 = vrot.slane %v1702, %v1709
  %v1712 = vunpack.c.l.s4 1966171168
  %v1713 = vunpack.c.0.s8 %v1712
  %v1714 = vlaneseq
  %v1715 = vshrl.u32 %v1714, 7
  %v1716 = vsub.s32 %v1713, %v1715
  %v1717 = vrot.slane %v1703, %v1716
  %v1718 = vcombine.low %v1710, %v1717
  %v1719 = vcombine.low %v212, %v213
  %v1720 = vcombine.low %v214, %v215
  %v1721 = vcombine.low %v216, %v217
  %v1722 = vcombine.low %v218, %v219
  %v1724 = vunpack.c.l.s4 1966171168
  %v1725 = vunpack.c.0.s8 %v1724
  %v1726 = vlaneseq
  %v1727 = vshrl.u32 %v1726, 7
  %v1728 = vsub.s32 %v1725, %v1727
  %v1729 = vrot.slane %v1719, %v1728
  %v1731 = vunpack.c.l.s4 1966171168
  %v1732 = vunpack.c.0.s8 %v1731
  %v1733 = vlaneseq
  %v1734 = vshrl.u32 %v1733, 7
  %v1735 = vsub.s32 %v1732, %v1734
  %v1736 = vrot.slane %v1720, %v1735
  %v1738 = vunpack.c.l.s4 1966171168
  %v1739 = vunpack.c.0.s8 %v1738
  %v1740 = vlaneseq
  %v1741 = vshrl.u32 %v1740, 7
  %v1742 = vsub.s32 %v1739, %v1741
  %v1743 = vrot.slane %v1721, %v1742
  %v1745 = vunpack.c.l.s4 1966171168
  %v1746 = vunpack.c.0.s8 %v1745
  %v1747 = vlaneseq
  %v1748 = vshrl.u32 %v1747, 7
  %v1749 = vsub.s32 %v1746, %v1748
  %v1750 = vrot.slane %v1722, %v1749
  %v1751 = vcombine.low %v1729, %v1736
  %v1752 = vcombine.low %v1743, %v1750
  %v1754 = vunpack.c.l.s4 1966171168
  %v1755 = vunpack.c.0.s8 %v1754
  %v1756 = vlaneseq
  %v1757 = vshrl.u32 %v1756, 7
  %v1758 = vsub.s32 %v1755, %v1757
  %v1759 = vrot.slane %v1751, %v1758
  %v1761 = vunpack.c.l.s4 1966171168
  %v1762 = vunpack.c.0.s8 %v1761
  %v1763 = vlaneseq
  %v1764 = vshrl.u32 %v1763, 7
  %v1765 = vsub.s32 %v1762, %v1764
  %v1766 = vrot.slane %v1752, %v1765
  %v1767 = vcombine.low %v1759, %v1766
  %v1768 = vcombine.low %v220, %v221
  %v1769 = vcombine.low %v222, %v223
  %v1770 = vcombine.low %v224, %v225
  %v1771 = vcombine.low %v226, %v227
  %v1773 = vunpack.c.l.s4 1966171168
  %v1774 = vunpack.c.0.s8 %v1773
  %v1775 = vlaneseq
  %v1776 = vshrl.u32 %v1775, 7
  %v1777 = vsub.s32 %v1774, %v1776
  %v1778 = vrot.slane %v1768, %v1777
  %v1780 = vunpack.c.l.s4 1966171168
  %v1781 = vunpack.c.0.s8 %v1780
  %v1782 = vlaneseq
  %v1783 = vshrl.u32 %v1782, 7
  %v1784 = vsub.s32 %v1781, %v1783
  %v1785 = vrot.slane %v1769, %v1784
  %v1787 = vunpack.c.l.s4 1966171168
  %v1788 = vunpack.c.0.s8 %v1787
  %v1789 = vlaneseq
  %v1790 = vshrl.u32 %v1789, 7
  %v1791 = vsub.s32 %v1788, %v1790
  %v1792 = vrot.slane %v1770, %v1791
  %v1794 = vunpack.c.l.s4 1966171168
  %v1795 = vunpack.c.0.s8 %v1794
  %v1796 = vlaneseq
  %v1797 = vshrl.u32 %v1796, 7
  %v1798 = vsub.s32 %v1795, %v1797
  %v1799 = vrot.slane %v1771, %v1798
  %v1800 = vcombine.low %v1778, %v1785
  %v1801 = vcombine.low %v1792, %v1799
  %v1803 = vunpack.c.l.s4 1966171168
  %v1804 = vunpack.c.0.s8 %v1803
  %v1805 = vlaneseq
  %v1806 = vshrl.u32 %v1805, 7
  %v1807 = vsub.s32 %v1804, %v1806
  %v1808 = vrot.slane %v1800, %v1807
  %v1810 = vunpack.c.l.s4 1966171168
  %v1811 = vunpack.c.0.s8 %v1810
  %v1812 = vlaneseq
  %v1813 = vshrl.u32 %v1812, 7
  %v1814 = vsub.s32 %v1811, %v1813
  %v1815 = vrot.slane %v1801, %v1814
  %v1816 = vcombine.low %v1808, %v1815
  %v1817 = vcombine.low %v228, %v229
  %v1818 = vcombine.low %v230, %v231
  %v1819 = vcombine.low %v232, %v233
  %v1820 = vcombine.low %v234, %v235
  %v1822 = vunpack.c.l.s4 1966171168
  %v1823 = vunpack.c.0.s8 %v1822
  %v1824 = vlaneseq
  %v1825 = vshrl.u32 %v1824, 7
  %v1826 = vsub.s32 %v1823, %v1825
  %v1827 = vrot.slane %v1817, %v1826
  %v1829 = vunpack.c.l.s4 1966171168
  %v1830 = vunpack.c.0.s8 %v1829
  %v1831 = vlaneseq
  %v1832 = vshrl.u32 %v1831, 7
  %v1833 = vsub.s32 %v1830, %v1832
  %v1834 = vrot.slane %v1818, %v1833
  %v1836 = vunpack.c.l.s4 1966171168
  %v1837 = vunpack.c.0.s8 %v1836
  %v1838 = vlaneseq
  %v1839 = vshrl.u32 %v1838, 7
  %v1840 = vsub.s32 %v1837, %v1839
  %v1841 = vrot.slane %v1819, %v1840
  %v1843 = vunpack.c.l.s4 1966171168
  %v1844 = vunpack.c.0.s8 %v1843
  %v1845 = vlaneseq
  %v1846 = vshrl.u32 %v1845, 7
  %v1847 = vsub.s32 %v1844, %v1846
  %v1848 = vrot.slane %v1820, %v1847
  %v1849 = vcombine.low %v1827, %v1834
  %v1850 = vcombine.low %v1841, %v1848
  %v1852 = vunpack.c.l.s4 1966171168
  %v1853 = vunpack.c.0.s8 %v1852
  %v1854 = vlaneseq
  %v1855 = vshrl.u32 %v1854, 7
  %v1856 = vsub.s32 %v1853, %v1855
  %v1857 = vrot.slane %v1849, %v1856
  %v1859 = vunpack.c.l.s4 1966171168
  %v1860 = vunpack.c.0.s8 %v1859
  %v1861 = vlaneseq
  %v1862 = vshrl.u32 %v1861, 7
  %v1863 = vsub.s32 %v1860, %v1862
  %v1864 = vrot.slane %v1850, %v1863
  %v1865 = vcombine.low %v1857, %v1864
  %v1866 = vcombine.low %v236, %v237
  %v1867 = vcombine.low %v238, %v239
  %v1868 = vcombine.low %v240, %v241
  %v1869 = vcombine.low %v242, %v243
  %v1871 = vunpack.c.l.s4 1966171168
  %v1872 = vunpack.c.0.s8 %v1871
  %v1873 = vlaneseq
  %v1874 = vshrl.u32 %v1873, 7
  %v1875 = vsub.s32 %v1872, %v1874
  %v1876 = vrot.slane %v1866, %v1875
  %v1878 = vunpack.c.l.s4 1966171168
  %v1879 = vunpack.c.0.s8 %v1878
  %v1880 = vlaneseq
  %v1881 = vshrl.u32 %v1880, 7
  %v1882 = vsub.s32 %v1879, %v1881
  %v1883 = vrot.slane %v1867, %v1882
  %v1885 = vunpack.c.l.s4 1966171168
  %v1886 = vunpack.c.0.s8 %v1885
  %v1887 = vlaneseq
  %v1888 = vshrl.u32 %v1887, 7
  %v1889 = vsub.s32 %v1886, %v1888
  %v1890 = vrot.slane %v1868, %v1889
  %v1892 = vunpack.c.l.s4 1966171168
  %v1893 = vunpack.c.0.s8 %v1892
  %v1894 = vlaneseq
  %v1895 = vshrl.u32 %v1894, 7
  %v1896 = vsub.s32 %v1893, %v1895
  %v1897 = vrot.slane %v1869, %v1896
  %v1898 = vcombine.low %v1876, %v1883
  %v1899 = vcombine.low %v1890, %v1897
  %v1901 = vunpack.c.l.s4 1966171168
  %v1902 = vunpack.c.0.s8 %v1901
  %v1903 = vlaneseq
  %v1904 = vshrl.u32 %v1903, 7
  %v1905 = vsub.s32 %v1902, %v1904
  %v1906 = vrot.slane %v1898, %v1905
  %v1908 = vunpack.c.l.s4 1966171168
  %v1909 = vunpack.c.0.s8 %v1908
  %v1910 = vlaneseq
  %v1911 = vshrl.u32 %v1910, 7
  %v1912 = vsub.s32 %v1909, %v1911
  %v1913 = vrot.slane %v1899, %v1912
  %v1914 = vcombine.low %v1906, %v1913
  %v1915 = vcombine.low %v244, %v245
  %v1916 = vcombine.low %v246, %v247
  %v1917 = vcombine.low %v248, %v249
  %v1918 = vcombine.low %v250, %v251
  %v1920 = vunpack.c.l.s4 1966171168
  %v1921 = vunpack.c.0.s8 %v1920
  %v1922 = vlaneseq
  %v1923 = vshrl.u32 %v1922, 7
  %v1924 = vsub.s32 %v1921, %v1923
  %v1925 = vrot.slane %v1915, %v1924
  %v1927 = vunpack.c.l.s4 1966171168
  %v1928 = vunpack.c.0.s8 %v1927
  %v1929 = vlaneseq
  %v1930 = vshrl.u32 %v1929, 7
  %v1931 = vsub.s32 %v1928, %v1930
  %v1932 = vrot.slane %v1916, %v1931
  %v1934 = vunpack.c.l.s4 1966171168
  %v1935 = vunpack.c.0.s8 %v1934
  %v1936 = vlaneseq
  %v1937 = vshrl.u32 %v1936, 7
  %v1938 = vsub.s32 %v1935, %v1937
  %v1939 = vrot.slane %v1917, %v1938
  %v1941 = vunpack.c.l.s4 1966171168
  %v1942 = vunpack.c.0.s8 %v1941
  %v1943 = vlaneseq
  %v1944 = vshrl.u32 %v1943, 7
  %v1945 = vsub.s32 %v1942, %v1944
  %v1946 = vrot.slane %v1918, %v1945
  %v1947 = vcombine.low %v1925, %v1932
  %v1948 = vcombine.low %v1939, %v1946
  %v1950 = vunpack.c.l.s4 1966171168
  %v1951 = vunpack.c.0.s8 %v1950
  %v1952 = vlaneseq
  %v1953 = vshrl.u32 %v1952, 7
  %v1954 = vsub.s32 %v1951, %v1953
  %v1955 = vrot.slane %v1947, %v1954
  %v1957 = vunpack.c.l.s4 1966171168
  %v1958 = vunpack.c.0.s8 %v1957
  %v1959 = vlaneseq
  %v1960 = vshrl.u32 %v1959, 7
  %v1961 = vsub.s32 %v1958, %v1960
  %v1962 = vrot.slane %v1948, %v1961
  %v1963 = vcombine.low %v1955, %v1962
  %v1964 = vcombine.low %v252, %v253
  %v1965 = vcombine.low %v254, %v255
  %v1966 = vcombine.low %v256, %v257
  %v1967 = vcombine.low %v258, %v259
  %v1969 = vunpack.c.l.s4 1966171168
  %v1970 = vunpack.c.0.s8 %v1969
  %v1971 = vlaneseq
  %v1972 = vshrl.u32 %v1971, 7
  %v1973 = vsub.s32 %v1970, %v1972
  %v1974 = vrot.slane %v1964, %v1973
  %v1976 = vunpack.c.l.s4 1966171168
  %v1977 = vunpack.c.0.s8 %v1976
  %v1978 = vlaneseq
  %v1979 = vshrl.u32 %v1978, 7
  %v1980 = vsub.s32 %v1977, %v1979
  %v1981 = vrot.slane %v1965, %v1980
  %v1983 = vunpack.c.l.s4 1966171168
  %v1984 = vunpack.c.0.s8 %v1983
  %v1985 = vlaneseq
  %v1986 = vshrl.u32 %v1985, 7
  %v1987 = vsub.s32 %v1984, %v1986
  %v1988 = vrot.slane %v1966, %v1987
  %v1990 = vunpack.c.l.s4 1966171168
  %v1991 = vunpack.c.0.s8 %v1990
  %v1992 = vlaneseq
  %v1993 = vshrl.u32 %v1992, 7
  %v1994 = vsub.s32 %v1991, %v1993
  %v1995 = vrot.slane %v1967, %v1994
  %v1996 = vcombine.low %v1974, %v1981
  %v1997 = vcombine.low %v1988, %v1995
  %v1999 = vunpack.c.l.s4 1966171168
  %v2000 = vunpack.c.0.s8 %v1999
  %v2001 = vlaneseq
  %v2002 = vshrl.u32 %v2001, 7
  %v2003 = vsub.s32 %v2000, %v2002
  %v2004 = vrot.slane %v1996, %v2003
  %v2006 = vunpack.c.l.s4 1966171168
  %v2007 = vunpack.c.0.s8 %v2006
  %v2008 = vlaneseq
  %v2009 = vshrl.u32 %v2008, 7
  %v2010 = vsub.s32 %v2007, %v2009
  %v2011 = vrot.slane %v1997, %v2010
  %v2012 = vcombine.low %v2004, %v2011
  %v2013 = vcombine.low %v260, %v261
  %v2014 = vcombine.low %v262, %v263
  %v2015 = vcombine.low %v264, %v265
  %v2016 = vcombine.low %v266, %v267
  %v2018 = vunpack.c.l.s4 1966171168
  %v2019 = vunpack.c.0.s8 %v2018
  %v2020 = vlaneseq
  %v2021 = vshrl.u32 %v2020, 7
  %v2022 = vsub.s32 %v2019, %v2021
  %v2023 = vrot.slane %v2013, %v2022
  %v2025 = vunpack.c.l.s4 1966171168
  %v2026 = vunpack.c.0.s8 %v2025
  %v2027 = vlaneseq
  %v2028 = vshrl.u32 %v2027, 7
  %v2029 = vsub.s32 %v2026, %v2028
  %v2030 = vrot.slane %v2014, %v2029
  %v2032 = vunpack.c.l.s4 1966171168
  %v2033 = vunpack.c.0.s8 %v2032
  %v2034 = vlaneseq
  %v2035 = vshrl.u32 %v2034, 7
  %v2036 = vsub.s32 %v2033, %v2035
  %v2037 = vrot.slane %v2015, %v2036
  %v2039 = vunpack.c.l.s4 1966171168
  %v2040 = vunpack.c.0.s8 %v2039
  %v2041 = vlaneseq
  %v2042 = vshrl.u32 %v2041, 7
  %v2043 = vsub.s32 %v2040, %v2042
  %v2044 = vrot.slane %v2016, %v2043
  %v2045 = vcombine.low %v2023, %v2030
  %v2046 = vcombine.low %v2037, %v2044
  %v2048 = vunpack.c.l.s4 1966171168
  %v2049 = vunpack.c.0.s8 %v2048
  %v2050 = vlaneseq
  %v2051 = vshrl.u32 %v2050, 7
  %v2052 = vsub.s32 %v2049, %v2051
  %v2053 = vrot.slane %v2045, %v2052
  %v2055 = vunpack.c.l.s4 1966171168
  %v2056 = vunpack.c.0.s8 %v2055
  %v2057 = vlaneseq
  %v2058 = vshrl.u32 %v2057, 7
  %v2059 = vsub.s32 %v2056, %v2058
  %v2060 = vrot.slane %v2046, %v2059
  %v2061 = vcombine.low %v2053, %v2060
  %v2062 = vcombine.low %v268, %v269
  %v2063 = vcombine.low %v270, %v271
  %v2064 = vcombine.low %v272, %v273
  %v2065 = vcombine.low %v274, %v275
  %v2067 = vunpack.c.l.s4 1966171168
  %v2068 = vunpack.c.0.s8 %v2067
  %v2069 = vlaneseq
  %v2070 = vshrl.u32 %v2069, 7
  %v2071 = vsub.s32 %v2068, %v2070
  %v2072 = vrot.slane %v2062, %v2071
  %v2074 = vunpack.c.l.s4 1966171168
  %v2075 = vunpack.c.0.s8 %v2074
  %v2076 = vlaneseq
  %v2077 = vshrl.u32 %v2076, 7
  %v2078 = vsub.s32 %v2075, %v2077
  %v2079 = vrot.slane %v2063, %v2078
  %v2081 = vunpack.c.l.s4 1966171168
  %v2082 = vunpack.c.0.s8 %v2081
  %v2083 = vlaneseq
  %v2084 = vshrl.u32 %v2083, 7
  %v2085 = vsub.s32 %v2082, %v2084
  %v2086 = vrot.slane %v2064, %v2085
  %v2088 = vunpack.c.l.s4 1966171168
  %v2089 = vunpack.c.0.s8 %v2088
  %v2090 = vlaneseq
  %v2091 = vshrl.u32 %v2090, 7
  %v2092 = vsub.s32 %v2089, %v2091
  %v2093 = vrot.slane %v2065, %v2092
  %v2094 = vcombine.low %v2072, %v2079
  %v2095 = vcombine.low %v2086, %v2093
  %v2097 = vunpack.c.l.s4 1966171168
  %v2098 = vunpack.c.0.s8 %v2097
  %v2099 = vlaneseq
  %v2100 = vshrl.u32 %v2099, 7
  %v2101 = vsub.s32 %v2098, %v2100
  %v2102 = vrot.slane %v2094, %v2101
  %v2104 = vunpack.c.l.s4 1966171168
  %v2105 = vunpack.c.0.s8 %v2104
  %v2106 = vlaneseq
  %v2107 = vshrl.u32 %v2106, 7
  %v2108 = vsub.s32 %v2105, %v2107
  %v2109 = vrot.slane %v2095, %v2108
  %v2110 = vcombine.low %v2102, %v2109
  %vm2111 = vcmask 261120
  %v2112 = vsel %vm2111, %v591, 0
  %v2114 = vsel %vm2111, %v640, 0
  %v2116 = vsel %vm2111, %v689, 0
  %v2118 = vsel %vm2111, %v738, 0
  %v2120 = vsel %vm2111, %v787, 0
  %v2122 = vsel %vm2111, %v836, 0
  %v2124 = vsel %vm2111, %v885, 0
  %v2126 = vsel %vm2111, %v934, 0
  %v2128 = vsel %vm2111, %v983, 0
  %v2130 = vsel %vm2111, %v1032, 0
  %v2132 = vsel %vm2111, %v1081, 0
  %v2134 = vsel %vm2111, %v1130, 0
  %v2136 = vsel %vm2111, %v1179, 0
  %v2138 = vsel %vm2111, %v1228, 0
  %v2140 = vsel %vm2111, %v1277, 0
  %v2142 = vsel %vm2111, %v1326, 0
  %v2144 = vsel %vm2111, %v1375, 0
  %v2146 = vsel %vm2111, %v1424, 0
  %v2148 = vsel %vm2111, %v1473, 0
  %v2150 = vsel %vm2111, %v1522, 0
  %v2152 = vsel %vm2111, %v1571, 0
  %v2154 = vsel %vm2111, %v1620, 0
  %v2156 = vsel %vm2111, %v1669, 0
  %v2158 = vsel %vm2111, %v1718, 0
  %v2160 = vsel %vm2111, %v1767, 0
  %v2162 = vsel %vm2111, %v1816, 0
  %v2164 = vsel %vm2111, %v1865, 0
  %v2166 = vsel %vm2111, %v1914, 0
  %v2168 = vsel %vm2111, %v1963, 0
  %v2170 = vsel %vm2111, %v2012, 0
  %v2172 = vsel %vm2111, %v2061, 0
  %v2174 = vsel %vm2111, %v2110, 0
  %2176 = vmatprep.subr.mxu0 0.0
  %2177 = vmatpush1.msra.mxu0 0.0
  %2178 = vmatprep.subr.mxu0 0.0
  %2179 = vmatpush1.msra.mxu0 0.0
  %2180 = vmatprep.subr.mxu0 0.0
  %2181 = vmatpush1.msra.mxu0 0.0
  %2182 = vmatprep.subr.mxu0 0.0
  %2183 = vmatpush1.msra.mxu0 0.0
  %2184 = vmatprep.subr.mxu0 0.0
  %2185 = vmatpush1.msra.mxu0 0.0
  %2186 = vmatprep.subr.mxu0 0.0
  %2187 = vmatpush1.msra.mxu0 0.0
  %2188 = vmatprep.subr.mxu0 0.0
  %2189 = vmatpush1.msra.mxu0 0.0
  %2190 = vmatprep.subr.mxu0 0.0
  %2191 = vmatpush1.msra.mxu0 0.0
  %2192 = vmatprep.subr.mxu0 0.0
  %2193 = vmatpush1.msra.mxu0 0.0
  %2194 = vmatprep.subr.mxu0 0.0
  %2195 = vmatpush1.msra.mxu0 0.0
  %2196 = vmatprep.subr.mxu0 0.0
  %2197 = vmatpush1.msra.mxu0 0.0
  %2198 = vmatprep.subr.mxu0 0.0
  %2199 = vmatpush1.msra.mxu0 0.0
  %2200 = vmatprep.subr.mxu0 0.0
  %2201 = vmatpush1.msra.mxu0 %v279
  %2202 = vmatprep.subr.mxu0 0.0
  %2203 = vmatpush1.msra.mxu0 %v278
  %2204 = vmatprep.subr.mxu0 0.0
  %2205 = vmatpush1.msra.mxu0 %v277
  %2206 = vmatprep.subr.mxu0 0.0
  %2207 = vmatpush1.msra.mxu0 %v276
  %2208 = vmatprep.subr.mxu0 0.0
  %2209 = vmatpush2.msra.mxu0 0.0
  %2210 = vmatprep.subr.mxu0 0.0
  %2211 = vmatpush2.msra.mxu0 0.0
  %2212 = vmatprep.subr.mxu0 0.0
  %2213 = vmatpush2.msra.mxu0 0.0
  %2214 = vmatprep.subr.mxu0 0.0
  %2215 = vmatpush2.msra.mxu0 0.0
  %2216 = vmatprep.subr.mxu0 0.0
  %2217 = vmatpush2.msra.mxu0 0.0
  %2218 = vmatprep.subr.mxu0 0.0
  %2219 = vmatpush2.msra.mxu0 0.0
  %2220 = vmatprep.subr.mxu0 0.0
  %2221 = vmatpush2.msra.mxu0 0.0
  %2222 = vmatprep.subr.mxu0 0.0
  %2223 = vmatpush2.msra.mxu0 0.0
  %2224 = vmatprep.subr.mxu0 0.0
  %2225 = vmatpush2.msra.mxu0 0.0
  %2226 = vmatprep.subr.mxu0 0.0
  %2227 = vmatpush2.msra.mxu0 0.0
  %2228 = vmatprep.subr.mxu0 0.0
  %2229 = vmatpush2.msra.mxu0 0.0
  %2230 = vmatprep.subr.mxu0 0.0
  %2231 = vmatpush2.msra.mxu0 0.0
  %2232 = vmatprep.subr.mxu0 0.0
  %2233 = vmatpush2.msra.mxu0 0.0
  %2234 = vmatprep.subr.mxu0 0.0
  %2235 = vmatpush2.msra.mxu0 0.0
  %2236 = vmatprep.subr.mxu0 0.0
  %2237 = vmatpush2.msra.mxu0 0.0
  %2238 = vmatprep.subr.mxu0 0.0
  %2239 = vmatpush2.msra.mxu0 0.0
  %2240 = vmatprep.mubr.f32.mxu0 0.0
  %2241 = vmatmul.mubr.f32.gmra.mxu0 %v2112
  %v2242 = vpop.f32.mrf.mxu0
  %v2243 = vadd.f32 %v285, %v2242
  %v2244 = vpop.f32.mrf.mxu0
  %2245 = vmatprep.mubr.f32.mxu0 0.0
  %2246 = vmatmul.mubr.f32.gmra.mxu0 %v2114
  %v2247 = vpop.f32.mrf.mxu0
  %v2248 = vadd.f32 %v285, %v2247
  %v2249 = vpop.f32.mrf.mxu0
  %2250 = vmatprep.mubr.f32.mxu0 0.0
  %2251 = vmatmul.mubr.f32.gmra.mxu0 %v2116
  %v2252 = vpop.f32.mrf.mxu0
  %v2253 = vadd.f32 %v285, %v2252
  %v2254 = vpop.f32.mrf.mxu0
  %2255 = vmatprep.mubr.f32.mxu0 0.0
  %2256 = vmatmul.mubr.f32.gmra.mxu0 %v2118
  %v2257 = vpop.f32.mrf.mxu0
  %v2258 = vadd.f32 %v285, %v2257
  %v2259 = vpop.f32.mrf.mxu0
  %2260 = vmatprep.mubr.f32.mxu0 0.0
  %2261 = vmatmul.mubr.f32.gmra.mxu0 %v2120
  %v2262 = vpop.f32.mrf.mxu0
  %v2263 = vadd.f32 %v285, %v2262
  %v2264 = vpop.f32.mrf.mxu0
  %2265 = vmatprep.mubr.f32.mxu0 0.0
  %2266 = vmatmul.mubr.f32.gmra.mxu0 %v2122
  %v2267 = vpop.f32.mrf.mxu0
  %v2268 = vadd.f32 %v285, %v2267
  %v2269 = vpop.f32.mrf.mxu0
  %2270 = vmatprep.mubr.f32.mxu0 0.0
  %2271 = vmatmul.mubr.f32.gmra.mxu0 %v2124
  %v2272 = vpop.f32.mrf.mxu0
  %v2273 = vadd.f32 %v285, %v2272
  %v2274 = vpop.f32.mrf.mxu0
  %2275 = vmatprep.mubr.f32.mxu0 0.0
  %2276 = vmatmul.mubr.f32.gmra.mxu0 %v2126
  %v2277 = vpop.f32.mrf.mxu0
  %v2278 = vadd.f32 %v285, %v2277
  %v2279 = vpop.f32.mrf.mxu0
  %2280 = vmatprep.mubr.f32.mxu0 0.0
  %2281 = vmatmul.mubr.f32.gmra.mxu0 %v2128
  %v2282 = vpop.f32.mrf.mxu0
  %v2283 = vadd.f32 %v285, %v2282
  %v2284 = vpop.f32.mrf.mxu0
  %2285 = vmatprep.mubr.f32.mxu0 0.0
  %2286 = vmatmul.mubr.f32.gmra.mxu0 %v2130
  %v2287 = vpop.f32.mrf.mxu0
  %v2288 = vadd.f32 %v285, %v2287
  %v2289 = vpop.f32.mrf.mxu0
  %2290 = vmatprep.mubr.f32.mxu0 0.0
  %2291 = vmatmul.mubr.f32.gmra.mxu0 %v2132
  %v2292 = vpop.f32.mrf.mxu0
  %v2293 = vadd.f32 %v285, %v2292
  %v2294 = vpop.f32.mrf.mxu0
  %2295 = vmatprep.mubr.f32.mxu0 0.0
  %2296 = vmatmul.mubr.f32.gmra.mxu0 %v2134
  %v2297 = vpop.f32.mrf.mxu0
  %v2298 = vadd.f32 %v285, %v2297
  %v2299 = vpop.f32.mrf.mxu0
  %2300 = vmatprep.mubr.f32.mxu0 0.0
  %2301 = vmatmul.mubr.f32.gmra.mxu0 %v2136
  %v2302 = vpop.f32.mrf.mxu0
  %v2303 = vadd.f32 %v285, %v2302
  %v2304 = vpop.f32.mrf.mxu0
  %2305 = vmatprep.mubr.f32.mxu0 0.0
  %2306 = vmatmul.mubr.f32.gmra.mxu0 %v2138
  %v2307 = vpop.f32.mrf.mxu0
  %v2308 = vadd.f32 %v285, %v2307
  %v2309 = vpop.f32.mrf.mxu0
  %2310 = vmatprep.mubr.f32.mxu0 0.0
  %2311 = vmatmul.mubr.f32.gmra.mxu0 %v2140
  %v2312 = vpop.f32.mrf.mxu0
  %v2313 = vadd.f32 %v285, %v2312
  %v2314 = vpop.f32.mrf.mxu0
  %2315 = vmatprep.mubr.f32.mxu0 0.0
  %2316 = vmatmul.mubr.f32.gmra.mxu0 %v2142
  %v2317 = vpop.f32.mrf.mxu0
  %v2318 = vadd.f32 %v285, %v2317
  %v2319 = vpop.f32.mrf.mxu0
  %2320 = vmatprep.mubr.f32.mxu0 0.0
  %2321 = vmatmul.mubr.f32.gmra.mxu0 %v2144
  %v2322 = vpop.f32.mrf.mxu0
  %v2323 = vadd.f32 %v285, %v2322
  %v2324 = vpop.f32.mrf.mxu0
  %2325 = vmatprep.mubr.f32.mxu0 0.0
  %2326 = vmatmul.mubr.f32.gmra.mxu0 %v2146
  %v2327 = vpop.f32.mrf.mxu0
  %v2328 = vadd.f32 %v285, %v2327
  %v2329 = vpop.f32.mrf.mxu0
  %2330 = vmatprep.mubr.f32.mxu0 0.0
  %2331 = vmatmul.mubr.f32.gmra.mxu0 %v2148
  %v2332 = vpop.f32.mrf.mxu0
  %v2333 = vadd.f32 %v285, %v2332
  %v2334 = vpop.f32.mrf.mxu0
  %2335 = vmatprep.mubr.f32.mxu0 0.0
  %2336 = vmatmul.mubr.f32.gmra.mxu0 %v2150
  %v2337 = vpop.f32.mrf.mxu0
  %v2338 = vadd.f32 %v285, %v2337
  %v2339 = vpop.f32.mrf.mxu0
  %2340 = vmatprep.mubr.f32.mxu0 0.0
  %2341 = vmatmul.mubr.f32.gmra.mxu0 %v2152
  %v2342 = vpop.f32.mrf.mxu0
  %v2343 = vadd.f32 %v285, %v2342
  %v2344 = vpop.f32.mrf.mxu0
  %2345 = vmatprep.mubr.f32.mxu0 0.0
  %2346 = vmatmul.mubr.f32.gmra.mxu0 %v2154
  %v2347 = vpop.f32.mrf.mxu0
  %v2348 = vadd.f32 %v285, %v2347
  %v2349 = vpop.f32.mrf.mxu0
  %2350 = vmatprep.mubr.f32.mxu0 0.0
  %2351 = vmatmul.mubr.f32.gmra.mxu0 %v2156
  %v2352 = vpop.f32.mrf.mxu0
  %v2353 = vadd.f32 %v285, %v2352
  %v2354 = vpop.f32.mrf.mxu0
  %2355 = vmatprep.mubr.f32.mxu0 0.0
  %2356 = vmatmul.mubr.f32.gmra.mxu0 %v2158
  %v2357 = vpop.f32.mrf.mxu0
  %v2358 = vadd.f32 %v285, %v2357
  %v2359 = vpop.f32.mrf.mxu0
  %2360 = vmatprep.mubr.f32.mxu0 0.0
  %2361 = vmatmul.mubr.f32.gmra.mxu0 %v2160
  %v2362 = vpop.f32.mrf.mxu0
  %v2363 = vadd.f32 %v285, %v2362
  %v2364 = vpop.f32.mrf.mxu0
  %2365 = vmatprep.mubr.f32.mxu0 0.0
  %2366 = vmatmul.mubr.f32.gmra.mxu0 %v2162
  %v2367 = vpop.f32.mrf.mxu0
  %v2368 = vadd.f32 %v285, %v2367
  %v2369 = vpop.f32.mrf.mxu0
  %2370 = vmatprep.mubr.f32.mxu0 0.0
  %2371 = vmatmul.mubr.f32.gmra.mxu0 %v2164
  %v2372 = vpop.f32.mrf.mxu0
  %v2373 = vadd.f32 %v285, %v2372
  %v2374 = vpop.f32.mrf.mxu0
  %2375 = vmatprep.mubr.f32.mxu0 0.0
  %2376 = vmatmul.mubr.f32.gmra.mxu0 %v2166
  %v2377 = vpop.f32.mrf.mxu0
  %v2378 = vadd.f32 %v285, %v2377
  %v2379 = vpop.f32.mrf.mxu0
  %2380 = vmatprep.mubr.f32.mxu0 0.0
  %2381 = vmatmul.mubr.f32.gmra.mxu0 %v2168
  %v2382 = vpop.f32.mrf.mxu0
  %v2383 = vadd.f32 %v285, %v2382
  %v2384 = vpop.f32.mrf.mxu0
  %2385 = vmatprep.mubr.f32.mxu0 0.0
  %2386 = vmatmul.mubr.f32.gmra.mxu0 %v2170
  %v2387 = vpop.f32.mrf.mxu0
  %v2388 = vadd.f32 %v285, %v2387
  %v2389 = vpop.f32.mrf.mxu0
  %2390 = vmatprep.mubr.f32.mxu0 0.0
  %2391 = vmatmul.mubr.f32.gmra.mxu0 %v2172
  %v2392 = vpop.f32.mrf.mxu0
  %v2393 = vadd.f32 %v285, %v2392
  %v2394 = vpop.f32.mrf.mxu0
  %2395 = vmatprep.mubr.f32.mxu0 0.0
  %2396 = vmatmul.mubr.f32.gmra.mxu0 %v2174
  %v2397 = vpop.f32.mrf.mxu0
  %v2398 = vadd.f32 %v285, %v2397
  %v2399 = vpop.f32.mrf.mxu0
  %2400 = vdwg.mxu0
  %v2401 = vmax.f32 %v2243, 0.0
  %v2402 = vmax.f32 %v2248, 0.0
  %v2403 = vmax.f32 %v2253, 0.0
  %v2404 = vmax.f32 %v2258, 0.0
  %v2405 = vmax.f32 %v2263, 0.0
  %v2406 = vmax.f32 %v2268, 0.0
  %v2407 = vmax.f32 %v2273, 0.0
  %v2408 = vmax.f32 %v2278, 0.0
  %v2409 = vmax.f32 %v2283, 0.0
  %v2410 = vmax.f32 %v2288, 0.0
  %v2411 = vmax.f32 %v2293, 0.0
  %v2412 = vmax.f32 %v2298, 0.0
  %v2413 = vmax.f32 %v2303, 0.0
  %v2414 = vmax.f32 %v2308, 0.0
  %v2415 = vmax.f32 %v2313, 0.0
  %v2416 = vmax.f32 %v2318, 0.0
  %v2417 = vmax.f32 %v2323, 0.0
  %v2418 = vmax.f32 %v2328, 0.0
  %v2419 = vmax.f32 %v2333, 0.0
  %v2420 = vmax.f32 %v2338, 0.0
  %v2421 = vmax.f32 %v2343, 0.0
  %v2422 = vmax.f32 %v2348, 0.0
  %v2423 = vmax.f32 %v2353, 0.0
  %v2424 = vmax.f32 %v2358, 0.0
  %v2425 = vmax.f32 %v2363, 0.0
  %v2426 = vmax.f32 %v2368, 0.0
  %v2427 = vmax.f32 %v2373, 0.0
  %v2428 = vmax.f32 %v2378, 0.0
  %v2429 = vmax.f32 %v2383, 0.0
  %v2430 = vmax.f32 %v2388, 0.0
  %v2431 = vmax.f32 %v2393, 0.0
  %v2432 = vmax.f32 %v2398, 0.0
  %v2433 = vld [vmem:[%s3] sm:$0xff]
  %v2434 = vld [vmem:[%s3 + $0x8] sm:$0xff]
  %v2435 = vld [vmem:[%s3 + $0x10] sm:$0xff]
  %v2436 = vld [vmem:[%s3 + $0x18] sm:$0xff]
  %v2437 = vld [vmem:[%s3 + $0x20] sm:$0xff]
  %v2438 = vld [vmem:[%s3 + $0x28] sm:$0xff]
  %v2439 = vld [vmem:[%s3 + $0x30] sm:$0xff]
  %v2440 = vld [vmem:[%s3 + $0x38] sm:$0xff]
  %v2441 = vld [vmem:[%s3 + $0x40] sm:$0xff]
  %v2442 = vld [vmem:[%s3 + $0x48] sm:$0xff]
  %v2443 = vld [vmem:[%s3 + $0x50] sm:$0xff]
  %v2444 = vld [vmem:[%s3 + $0x58] sm:$0xff]
  %v2445 = vld [vmem:[%s3 + $0x60] sm:$0xff]
  %v2446 = vld [vmem:[%s3 + $0x68] sm:$0xff]
  %v2447 = vld [vmem:[%s3 + $0x70] sm:$0xff]
  %v2448 = vld [vmem:[%s3 + $0x78] sm:$0xff]
  %v2449 = vld [vmem:[%s4] sm:$0x1]
  %v2451 = vlaneseq
  %v2452 = vshrl.u32 %v2451, 7
  %v2453 = vsub.s32 0, %v2452
  %v2454 = vrot.slane %v2449, %v2453
  %2456 = vmatprep.subr.mxu0 0.0
  %2457 = vmatpush1.msra.mxu0 %v2448
  %2458 = vmatprep.subr.mxu0 0.0
  %2459 = vmatpush1.msra.mxu0 %v2447
  %2460 = vmatprep.subr.mxu0 0.0
  %2461 = vmatpush1.msra.mxu0 %v2446
  %2462 = vmatprep.subr.mxu0 0.0
  %2463 = vmatpush1.msra.mxu0 %v2445
  %2464 = vmatprep.subr.mxu0 0.0
  %2465 = vmatpush1.msra.mxu0 %v2444
  %2466 = vmatprep.subr.mxu0 0.0
  %2467 = vmatpush1.msra.mxu0 %v2443
  %2468 = vmatprep.subr.mxu0 0.0
  %2469 = vmatpush1.msra.mxu0 %v2442
  %2470 = vmatprep.subr.mxu0 0.0
  %2471 = vmatpush1.msra.mxu0 %v2441
  %2472 = vmatprep.subr.mxu0 0.0
  %2473 = vmatpush1.msra.mxu0 %v2440
  %2474 = vmatprep.subr.mxu0 0.0
  %2475 = vmatpush1.msra.mxu0 %v2439
  %2476 = vmatprep.subr.mxu0 0.0
  %2477 = vmatpush1.msra.mxu0 %v2438
  %2478 = vmatprep.subr.mxu0 0.0
  %2479 = vmatpush1.msra.mxu0 %v2437
  %2480 = vmatprep.subr.mxu0 0.0
  %2481 = vmatpush1.msra.mxu0 %v2436
  %2482 = vmatprep.subr.mxu0 0.0
  %2483 = vmatpush1.msra.mxu0 %v2435
  %2484 = vmatprep.subr.mxu0 0.0
  %2485 = vmatpush1.msra.mxu0 %v2434
  %2486 = vmatprep.subr.mxu0 0.0
  %2487 = vmatpush1.msra.mxu0 %v2433
  %2488 = vmatprep.subr.mxu0 0.0
  %2489 = vmatpush2.msra.mxu0 0.0
  %2490 = vmatprep.subr.mxu0 0.0
  %2491 = vmatpush2.msra.mxu0 0.0
  %2492 = vmatprep.subr.mxu0 0.0
  %2493 = vmatpush2.msra.mxu0 0.0
  %2494 = vmatprep.subr.mxu0 0.0
  %2495 = vmatpush2.msra.mxu0 0.0
  %2496 = vmatprep.subr.mxu0 0.0
  %2497 = vmatpush2.msra.mxu0 0.0
  %2498 = vmatprep.subr.mxu0 0.0
  %2499 = vmatpush2.msra.mxu0 0.0
  %2500 = vmatprep.subr.mxu0 0.0
  %2501 = vmatpush2.msra.mxu0 0.0
  %2502 = vmatprep.subr.mxu0 0.0
  %2503 = vmatpush2.msra.mxu0 0.0
  %2504 = vmatprep.subr.mxu0 0.0
  %2505 = vmatpush2.msra.mxu0 0.0
  %2506 = vmatprep.subr.mxu0 0.0
  %2507 = vmatpush2.msra.mxu0 0.0
  %2508 = vmatprep.subr.mxu0 0.0
  %2509 = vmatpush2.msra.mxu0 0.0
  %2510 = vmatprep.subr.mxu0 0.0
  %2511 = vmatpush2.msra.mxu0 0.0
  %2512 = vmatprep.subr.mxu0 0.0
  %2513 = vmatpush2.msra.mxu0 0.0
  %2514 = vmatprep.subr.mxu0 0.0
  %2515 = vmatpush2.msra.mxu0 0.0
  %2516 = vmatprep.subr.mxu0 0.0
  %2517 = vmatpush2.msra.mxu0 0.0
  %2518 = vmatprep.subr.mxu0 0.0
  %2519 = vmatpush2.msra.mxu0 0.0
  %2520 = vmatprep.mubr.f32.mxu0 0.0
  %2521 = vmatmul.mubr.f32.gmra.mxu0 %v2401
  %v2522 = vpop.f32.mrf.mxu0
  %v2523 = vadd.f32 %v2454, %v2522
  %v2524 = vpop.f32.mrf.mxu0
  %2525 = vmatprep.mubr.f32.mxu0 0.0
  %2526 = vmatmul.mubr.f32.gmra.mxu0 %v2402
  %v2527 = vpop.f32.mrf.mxu0
  %v2528 = vadd.f32 %v2454, %v2527
  %v2529 = vpop.f32.mrf.mxu0
  %2530 = vmatprep.mubr.f32.mxu0 0.0
  %2531 = vmatmul.mubr.f32.gmra.mxu0 %v2403
  %v2532 = vpop.f32.mrf.mxu0
  %v2533 = vadd.f32 %v2454, %v2532
  %v2534 = vpop.f32.mrf.mxu0
  %2535 = vmatprep.mubr.f32.mxu0 0.0
  %2536 = vmatmul.mubr.f32.gmra.mxu0 %v2404
  %v2537 = vpop.f32.mrf.mxu0
  %v2538 = vadd.f32 %v2454, %v2537
  %v2539 = vpop.f32.mrf.mxu0
  %2540 = vmatprep.mubr.f32.mxu0 0.0
  %2541 = vmatmul.mubr.f32.gmra.mxu0 %v2405
  %v2542 = vpop.f32.mrf.mxu0
  %v2543 = vadd.f32 %v2454, %v2542
  %v2544 = vpop.f32.mrf.mxu0
  %2545 = vmatprep.mubr.f32.mxu0 0.0
  %2546 = vmatmul.mubr.f32.gmra.mxu0 %v2406
  %v2547 = vpop.f32.mrf.mxu0
  %v2548 = vadd.f32 %v2454, %v2547
  %v2549 = vpop.f32.mrf.mxu0
  %2550 = vmatprep.mubr.f32.mxu0 0.0
  %2551 = vmatmul.mubr.f32.gmra.mxu0 %v2407
  %v2552 = vpop.f32.mrf.mxu0
  %v2553 = vadd.f32 %v2454, %v2552
  %v2554 = vpop.f32.mrf.mxu0
  %2555 = vmatprep.mubr.f32.mxu0 0.0
  %2556 = vmatmul.mubr.f32.gmra.mxu0 %v2408
  %v2557 = vpop.f32.mrf.mxu0
  %v2558 = vadd.f32 %v2454, %v2557
  %v2559 = vpop.f32.mrf.mxu0
  %2560 = vmatprep.mubr.f32.mxu0 0.0
  %2561 = vmatmul.mubr.f32.gmra.mxu0 %v2409
  %v2562 = vpop.f32.mrf.mxu0
  %v2563 = vadd.f32 %v2454, %v2562
  %v2564 = vpop.f32.mrf.mxu0
  %2565 = vmatprep.mubr.f32.mxu0 0.0
  %2566 = vmatmul.mubr.f32.gmra.mxu0 %v2410
  %v2567 = vpop.f32.mrf.mxu0
  %v2568 = vadd.f32 %v2454, %v2567
  %v2569 = vpop.f32.mrf.mxu0
  %2570 = vmatprep.mubr.f32.mxu0 0.0
  %2571 = vmatmul.mubr.f32.gmra.mxu0 %v2411
  %v2572 = vpop.f32.mrf.mxu0
  %v2573 = vadd.f32 %v2454, %v2572
  %v2574 = vpop.f32.mrf.mxu0
  %2575 = vmatprep.mubr.f32.mxu0 0.0
  %2576 = vmatmul.mubr.f32.gmra.mxu0 %v2412
  %v2577 = vpop.f32.mrf.mxu0
  %v2578 = vadd.f32 %v2454, %v2577
  %v2579 = vpop.f32.mrf.mxu0
  %2580 = vmatprep.mubr.f32.mxu0 0.0
  %2581 = vmatmul.mubr.f32.gmra.mxu0 %v2413
  %v2582 = vpop.f32.mrf.mxu0
  %v2583 = vadd.f32 %v2454, %v2582
  %v2584 = vpop.f32.mrf.mxu0
  %2585 = vmatprep.mubr.f32.mxu0 0.0
  %2586 = vmatmul.mubr.f32.gmra.mxu0 %v2414
  %v2587 = vpop.f32.mrf.mxu0
  %v2588 = vadd.f32 %v2454, %v2587
  %v2589 = vpop.f32.mrf.mxu0
  %2590 = vmatprep.mubr.f32.mxu0 0.0
  %2591 = vmatmul.mubr.f32.gmra.mxu0 %v2415
  %v2592 = vpop.f32.mrf.mxu0
  %v2593 = vadd.f32 %v2454, %v2592
  %v2594 = vpop.f32.mrf.mxu0
  %2595 = vmatprep.mubr.f32.mxu0 0.0
  %2596 = vmatmul.mubr.f32.gmra.mxu0 %v2416
  %v2597 = vpop.f32.mrf.mxu0
  %v2598 = vadd.f32 %v2454, %v2597
  %v2599 = vpop.f32.mrf.mxu0
  %2600 = vmatprep.mubr.f32.mxu0 0.0
  %2601 = vmatmul.mubr.f32.gmra.mxu0 %v2417
  %v2602 = vpop.f32.mrf.mxu0
  %v2603 = vadd.f32 %v2454, %v2602
  %v2604 = vpop.f32.mrf.mxu0
  %2605 = vmatprep.mubr.f32.mxu0 0.0
  %2606 = vmatmul.mubr.f32.gmra.mxu0 %v2418
  %v2607 = vpop.f32.mrf.mxu0
  %v2608 = vadd.f32 %v2454, %v2607
  %v2609 = vpop.f32.mrf.mxu0
  %2610 = vmatprep.mubr.f32.mxu0 0.0
  %2611 = vmatmul.mubr.f32.gmra.mxu0 %v2419
  %v2612 = vpop.f32.mrf.mxu0
  %v2613 = vadd.f32 %v2454, %v2612
  %v2614 = vpop.f32.mrf.mxu0
  %2615 = vmatprep.mubr.f32.mxu0 0.0
  %2616 = vmatmul.mubr.f32.gmra.mxu0 %v2420
  %v2617 = vpop.f32.mrf.mxu0
  %v2618 = vadd.f32 %v2454, %v2617
  %v2619 = vpop.f32.mrf.mxu0
  %2620 = vmatprep.mubr.f32.mxu0 0.0
  %2621 = vmatmul.mubr.f32.gmra.mxu0 %v2421
  %v2622 = vpop.f32.mrf.mxu0
  %v2623 = vadd.f32 %v2454, %v2622
  %v2624 = vpop.f32.mrf.mxu0
  %2625 = vmatprep.mubr.f32.mxu0 0.0
  %2626 = vmatmul.mubr.f32.gmra.mxu0 %v2422
  %v2627 = vpop.f32.mrf.mxu0
  %v2628 = vadd.f32 %v2454, %v2627
  %v2629 = vpop.f32.mrf.mxu0
  %2630 = vmatprep.mubr.f32.mxu0 0.0
  %2631 = vmatmul.mubr.f32.gmra.mxu0 %v2423
  %v2632 = vpop.f32.mrf.mxu0
  %v2633 = vadd.f32 %v2454, %v2632
  %v2634 = vpop.f32.mrf.mxu0
  %2635 = vmatprep.mubr.f32.mxu0 0.0
  %2636 = vmatmul.mubr.f32.gmra.mxu0 %v2424
  %v2637 = vpop.f32.mrf.mxu0
  %v2638 = vadd.f32 %v2454, %v2637
  %v2639 = vpop.f32.mrf.mxu0
  %2640 = vmatprep.mubr.f32.mxu0 0.0
  %2641 = vmatmul.mubr.f32.gmra.mxu0 %v2425
  %v2642 = vpop.f32.mrf.mxu0
  %v2643 = vadd.f32 %v2454, %v2642
  %v2644 = vpop.f32.mrf.mxu0
  %2645 = vmatprep.mubr.f32.mxu0 0.0
  %2646 = vmatmul.mubr.f32.gmra.mxu0 %v2426
  %v2647 = vpop.f32.mrf.mxu0
  %v2648 = vadd.f32 %v2454, %v2647
  %v2649 = vpop.f32.mrf.mxu0
  %2650 = vmatprep.mubr.f32.mxu0 0.0
  %2651 = vmatmul.mubr.f32.gmra.mxu0 %v2427
  %v2652 = vpop.f32.mrf.mxu0
  %v2653 = vadd.f32 %v2454, %v2652
  %v2654 = vpop.f32.mrf.mxu0
  %2655 = vmatprep.mubr.f32.mxu0 0.0
  %2656 = vmatmul.mubr.f32.gmra.mxu0 %v2428
  %v2657 = vpop.f32.mrf.mxu0
  %v2658 = vadd.f32 %v2454, %v2657
  %v2659 = vpop.f32.mrf.mxu0
  %2660 = vmatprep.mubr.f32.mxu0 0.0
  %2661 = vmatmul.mubr.f32.gmra.mxu0 %v2429
  %v2662 = vpop.f32.mrf.mxu0
  %v2663 = vadd.f32 %v2454, %v2662
  %v2664 = vpop.f32.mrf.mxu0
  %2665 = vmatprep.mubr.f32.mxu0 0.0
  %2666 = vmatmul.mubr.f32.gmra.mxu0 %v2430
  %v2667 = vpop.f32.mrf.mxu0
  %v2668 = vadd.f32 %v2454, %v2667
  %v2669 = vpop.f32.mrf.mxu0
  %2670 = vmatprep.mubr.f32.mxu0 0.0
  %2671 = vmatmul.mubr.f32.gmra.mxu0 %v2431
  %v2672 = vpop.f32.mrf.mxu0
  %v2673 = vadd.f32 %v2454, %v2672
  %v2674 = vpop.f32.mrf.mxu0
  %2675 = vmatprep.mubr.f32.mxu0 0.0
  %2676 = vmatmul.mubr.f32.gmra.mxu0 %v2432
  %v2677 = vpop.f32.mrf.mxu0
  %v2678 = vadd.f32 %v2454, %v2677
  %v2679 = vpop.f32.mrf.mxu0
  %2680 = vdwg.mxu0
  %2681 = vst [vmem:[%s5] sm:$0xff] %v2523
  %2682 = vst [vmem:[%s5 + $0x8] sm:$0xff] %v2528
  %2683 = vst [vmem:[%s5 + $0x10] sm:$0xff] %v2533
  %2684 = vst [vmem:[%s5 + $0x18] sm:$0xff] %v2538
  %2685 = vst [vmem:[%s5 + $0x20] sm:$0xff] %v2543
  %2686 = vst [vmem:[%s5 + $0x28] sm:$0xff] %v2548
  %2687 = vst [vmem:[%s5 + $0x30] sm:$0xff] %v2553
  %2688 = vst [vmem:[%s5 + $0x38] sm:$0xff] %v2558
  %2689 = vst [vmem:[%s5 + $0x40] sm:$0xff] %v2563
  %2690 = vst [vmem:[%s5 + $0x48] sm:$0xff] %v2568
  %2691 = vst [vmem:[%s5 + $0x50] sm:$0xff] %v2573
  %2692 = vst [vmem:[%s5 + $0x58] sm:$0xff] %v2578
  %2693 = vst [vmem:[%s5 + $0x60] sm:$0xff] %v2583
  %2694 = vst [vmem:[%s5 + $0x68] sm:$0xff] %v2588
  %2695 = vst [vmem:[%s5 + $0x70] sm:$0xff] %v2593
  %2696 = vst [vmem:[%s5 + $0x78] sm:$0xff] %v2598
  %2697 = vst [vmem:[%s5 + $0x80] sm:$0xff] %v2603
  %2698 = vst [vmem:[%s5 + $0x88] sm:$0xff] %v2608
  %2699 = vst [vmem:[%s5 + $0x90] sm:$0xff] %v2613
  %2700 = vst [vmem:[%s5 + $0x98] sm:$0xff] %v2618
  %2701 = vst [vmem:[%s5 + $0xa0] sm:$0xff] %v2623
  %2702 = vst [vmem:[%s5 + $0xa8] sm:$0xff] %v2628
  %2703 = vst [vmem:[%s5 + $0xb0] sm:$0xff] %v2633
  %2704 = vst [vmem:[%s5 + $0xb8] sm:$0xff] %v2638
  %2705 = vst [vmem:[%s5 + $0xc0] sm:$0xff] %v2643
  %2706 = vst [vmem:[%s5 + $0xc8] sm:$0xff] %v2648
  %2707 = vst [vmem:[%s5 + $0xd0] sm:$0xff] %v2653
  %2708 = vst [vmem:[%s5 + $0xd8] sm:$0xff] %v2658
  %2709 = vst [vmem:[%s5 + $0xe0] sm:$0xff] %v2663
  %2710 = vst [vmem:[%s5 + $0xe8] sm:$0xff] %v2668
  %2711 = vst [vmem:[%s5 + $0xf0] sm:$0xff] %v2673
  %2712 = vst [vmem:[%s5 + $0xf8] sm:$0xff] %v2678
  // Predicated region
  $region22: #{mlp_forward_padded.1} parent=0 // pred_check
    _
  $region23: #{mlp_forward_padded.1} parent=0 // pred_check_branch
    %2714 = sbr.rel (0) target = $region25
  $region24: #{mlp_forward_padded.1} parent=0 // pred_region
    _
  $region25: #{mlp_forward_padded.1} parent=0 // pred_fallthru
    _
  // Predicated region
  $region26: #{mlp_forward_padded.1} parent=0 // pred_check
    _
  $region27: #{mlp_forward_padded.1} parent=0 // pred_check_branch
    %2716 = sbr.rel (0) target = $region29
  $region28: #{mlp_forward_padded.1} parent=0 // pred_region
    _
  $region29: #{mlp_forward_padded.1} parent=0 // pred_fallthru
    _

</llo_original>
